<compile_context>
chip_gen: v5e
topology: v5e:2x2
jax: 0.10.0
libtpu: 0.0.40
codegen_flags: <defaults>
</compile_context>

<pallas_src>
import functools

import jax
import jax.numpy as jnp
from jax.experimental import pallas as pl
from jax.experimental.pallas import tpu as pltpu


# ----------------------------------------------------------------------------
# Fused kernel: one matmul + roll/mask/max pooling + bias + ReLU + FC.
# ----------------------------------------------------------------------------
def fused_textcnn_kernel(emb_ref, w_all_ref, b_ref, fcw_ref, fcb_ref, out_ref,
                         *, filter_sizes, f_pad):
    emb = emb_ref[...]                               # (TB, S, E) bf16
    TB, S, E = emb.shape
    x = emb.reshape(TB * S, E)

    # ONE lane-dense MXU matmul covering every (filter_size, tap) column block.
    p = jnp.dot(x, w_all_ref[...],
                preferred_element_type=jnp.float32)  # (TB*S, n_taps*f_pad) f32

    neg_inf = jnp.float32(-jnp.inf)
    # Time index of each row within its batch element (broadcast over lanes).
    t_idx = jax.lax.broadcasted_iota(jnp.int32, (1, S, f_pad), 1)

    rows = TB * S
    pooled = []
    tap = 0
    for fs in filter_sizes:
        # Sum the fs tap blocks, shift-aligning with sublane rolls (XLU) on
        # the small lane-dense f32 result instead of non-8-aligned slices.
        acc = p[:, tap * f_pad:(tap + 1) * f_pad]
        for k in range(1, fs):
            blk = p[:, (tap + k) * f_pad:(tap + k + 1) * f_pad]
            acc = acc + pltpu.roll(blk, shift=rows - k, axis=0)
        tap += fs
        acc = acc.reshape(TB, S, f_pad)
        # Rows t >= L picked up wrapped-around garbage from the roll: mask
        # them once before the max-over-time.
        L = S - fs + 1
        acc = jnp.where(t_idx < L, acc, neg_inf)
        pooled.append(jnp.max(acc, axis=1))          # (TB, f_pad)

    cat = jnp.concatenate(pooled, axis=1)            # (TB, n*f_pad)
    # Bias + ReLU after the pool (exact: bias constant over time, ReLU monotone).
    cat = jnp.maximum(cat + b_ref[...], 0.0)
    # TODO(synk): nn.Dropout is identity in eval mode; train-mode RNG dropout
    # is not reproduced here.
    logits = jnp.dot(cat.astype(jnp.bfloat16), fcw_ref[...],
                     preferred_element_type=jnp.float32) + fcb_ref[...]
    out_ref[...] = logits.astype(out_ref.dtype)


# ----------------------------------------------------------------------------
# Tiling / VMEM helpers.
# ----------------------------------------------------------------------------
def _vmem_limit_bytes():
    """Generation-aware scoped-VMEM limit: ~3/4 of capacity (48 MiB on a
    64 MiB/TC v7x, up to 96 MiB on 128 MiB v5e/v6e)."""
    cap = 64 * 1024 * 1024
    try:
        cap = int(pltpu.get_tpu_info().vmem_capacity_bytes)
    except Exception:
        pass
    return int(min(96 * 1024 * 1024, max(32 * 1024 * 1024, (cap * 3) // 4)))


def _pick_batch_tile(B, S, E, n_taps, f_pad, budget_bytes):
    """Largest multiple-of-8 batch tile whose real VMEM footprint fits.

    Footprint = double-buffered bf16 emb tile + f32 (TB*S, n_taps*f_pad)
    matmul output + rolled/accumulated tap buffers.  Also keeps the grid at
    >=2 steps (>=4 for larger batches) so v7x's second TensorCore and the
    DMA pipeline have work to overlap.
    """
    def tile_bytes(tb):
        emb_db = 2 * tb * S * E * 2                  # double-buffered bf16 emb
        p_f32 = tb * S * n_taps * f_pad * 4          # big matmul f32 output
        acc_f32 = 2 * tb * S * f_pad * 4             # rolled tap + running acc
        return emb_db + p_f32 + acc_f32

    b8 = max(8, ((B + 7) // 8) * 8)
    if B <= 8:
        min_steps = 1
    elif B < 32:
        min_steps = 2
    else:
        min_steps = 4
    for tb in (1024, 512, 256, 128, 64, 32, 16, 8):
        if tb > b8:
            continue
        if pl.cdiv(B, tb) < min_steps:
            continue
        if tile_bytes(tb) <= budget_bytes:
            return tb
    return 8


# ----------------------------------------------------------------------------
# Wrapper: embedding gather + weight packing + pallas_call.
# ----------------------------------------------------------------------------
def textcnn_forward(text, params, filter_sizes):
    """Full TextCNN forward.  Returns (B, num_class) float32 logits."""
    emb = jnp.take(params["embedding"], text, axis=0).astype(jnp.bfloat16)
    B, S, E = emb.shape
    n = len(filter_sizes)
    F = params["conv0_w"].shape[-1]
    C = params["fc_w"].shape[-1]
    assert max(filter_sizes) <= S, "filter size larger than sequence length"

    # Pad each tap's filter block to a multiple of 128 lanes -> lane-dense
    # intermediates everywhere in the kernel.
    F_pad = ((F + 127) // 128) * 128
    n_taps = sum(filter_sizes)

    # One concatenated weight matrix: a column block per (filter_size, tap).
    blocks = []
    for i, fs in enumerate(filter_sizes):
        w = params[f"conv{i}_w"].astype(jnp.bfloat16)            # (fs, E, F)
        for k in range(fs):
            blocks.append(jnp.pad(w[k], ((0, 0), (0, F_pad - F))))
    w_all = jnp.concatenate(blocks, axis=1)                      # (E, n_taps*F_pad)

    # Biases padded with zeros; FC weights get zero rows for the pad channels
    # so the padding never reaches the logits.
    b_cat = jnp.concatenate(
        [jnp.pad(params[f"conv{i}_b"].astype(jnp.float32),
                 ((0, 0), (0, F_pad - F))) for i in range(n)], axis=1)
    fc_w = jnp.concatenate(
        [jnp.pad(params["fc_w"][i * F:(i + 1) * F].astype(jnp.float32),
                 ((0, F_pad - F), (0, 0))) for i in range(n)],
        axis=0).astype(jnp.bfloat16)                             # (n*F_pad, C)
    fc_b = params["fc_b"].astype(jnp.float32)                    # (1, C)

    vmem_limit = _vmem_limit_bytes()
    weight_bytes = (w_all.size * 2 + b_cat.size * 4 + fc_w.size * 2
                    + fc_b.size * 4)
    budget = max(8 * 1024 * 1024, vmem_limit // 2 - weight_bytes)
    TB = _pick_batch_tile(B, S, E, n_taps, F_pad, budget)

    grid_b = pl.cdiv(B, TB)
    B_pad = grid_b * TB
    if B_pad != B:   # graceful handling of awkward / tiny batch sizes
        emb = jnp.pad(emb, ((0, B_pad - B), (0, 0), (0, 0)))

    kernel = functools.partial(fused_textcnn_kernel,
                               filter_sizes=tuple(filter_sizes), f_pad=F_pad)

    out = pl.pallas_call(
        kernel,
        out_shape=jax.ShapeDtypeStruct((B_pad, C), jnp.float32),
        grid_spec=pltpu.PrefetchScalarGridSpec(
            num_scalar_prefetch=0,
            grid=(grid_b,),
            in_specs=[
                pl.BlockSpec((TB, S, E), lambda i: (i, 0, 0)),   # streamed emb tile
                pl.BlockSpec(w_all.shape, lambda i: (0, 0)),     # VMEM-resident weights
                pl.BlockSpec(b_cat.shape, lambda i: (0, 0)),
                pl.BlockSpec(fc_w.shape, lambda i: (0, 0)),
                pl.BlockSpec(fc_b.shape, lambda i: (0, 0)),
            ],
            out_specs=pl.BlockSpec((TB, C), lambda i: (i, 0)),
        ),
        compiler_params=pltpu.CompilerParams(
            dimension_semantics=("parallel",),   # megacore sharding on v7x
            vmem_limit_bytes=vmem_limit,
        ),
    )(emb, w_all, b_cat, fc_w, fc_b)
    return out[:B]


# ----------------------------------------------------------------------------
# Deterministic parameter init + pure-JAX reference + demo.
# ----------------------------------------------------------------------------
def init_params(key, vocab_size, embed_dim, num_filters, filter_sizes,
                num_class, padding_idx):
    keys = jax.random.split(key, 2 + 2 * len(filter_sizes) + 2)
    params = {}
    emb = 0.1 * jax.random.normal(keys[0], (vocab_size, embed_dim), jnp.float32)
    emb = emb.at[padding_idx].set(0.0)      # padding_idx row is zero
    params["embedding"] = emb
    for i, fs in enumerate(filter_sizes):
        params[f"conv{i}_w"] = 0.1 * jax.random.normal(
            keys[1 + 2 * i], (fs, embed_dim, num_filters), jnp.float32)
        params[f"conv{i}_b"] = 0.1 * jax.random.normal(
            keys[2 + 2 * i], (1, num_filters), jnp.float32)
    total_f = num_filters * len(filter_sizes)
    params["fc_w"] = 0.1 * jax.random.normal(
        keys[-2], (total_f, num_class), jnp.float32)
    params["fc_b"] = 0.1 * jax.random.normal(
        keys[-1], (1, num_class), jnp.float32)
    return params


def textcnn_reference(text, params, filter_sizes):
    """Pure-JAX reference following the PyTorch op order (relu -> maxpool).

    Inputs are rounded to bf16 the same way the kernel streams them, so the
    comparison mostly exposes accumulation-order differences.
    """
    hi = jax.lax.Precision.HIGHEST
    emb = jnp.take(params["embedding"], text, axis=0)
    emb = emb.astype(jnp.bfloat16).astype(jnp.float32)
    pooled = []
    for i, fs in enumerate(filter_sizes):
        w = params[f"conv{i}_w"].astype(jnp.bfloat16).astype(jnp.float32)
        b = params[f"conv{i}_b"]
        B, S, E = emb.shape
        L = S - fs + 1
        acc = sum(
            jnp.einsum("ble,ef->blf", emb[:, k:k + L, :], w[k], precision=hi)
            for k in range(fs)
        )
        acc = jnp.maximum(acc + b[None, :, :], 0.0)   # ReLU(conv + b)
        pooled.append(jnp.max(acc, axis=1))           # max over time
    cat = jnp.concatenate(pooled, axis=1)
    cat = cat.astype(jnp.bfloat16).astype(jnp.float32)
    fc_w = params["fc_w"].astype(jnp.bfloat16).astype(jnp.float32)
    return jnp.dot(cat, fc_w, precision=hi) + params["fc_b"]


if __name__ == "__main__":
    # Small, shape-consistent config: batch=2, seq=16, embed=32,
    # num_filters=8, filter_sizes=[3,4,5], num_class=4, vocab=50.
    vocab_size, embed_dim = 50, 32
    num_filters, filter_sizes = 8, [3, 4, 5]
    num_class, padding_idx = 4, 1
    batch, seq_len = 2, 16

    key = jax.random.PRNGKey(0)
    k_param, k_text = jax.random.split(key)
    params = init_params(k_param, vocab_size, embed_dim, num_filters,
                         filter_sizes, num_class, padding_idx)
    text = jax.random.randint(k_text, (batch, seq_len), 0, vocab_size,
                              dtype=jnp.int32)

    logits = textcnn_forward(text, params, filter_sizes)
    logits = jax.block_until_ready(logits)

    ref = textcnn_reference(text, params, filter_sizes)
    assert logits.shape == (batch, num_class)
    assert jnp.allclose(logits, ref, atol=5e-3, rtol=5e-3), "mismatch vs reference"

    print("KERNEL_OK")
</pallas_src>

<mosaic_0001>
module attributes {stable_mosaic.version = 11 : i64} {
  func.func @fused_textcnn_kernel(%arg0: i32, %arg1: memref<8x16x32xbf16, #tpu.memory_space<vmem>>, %arg2: memref<32x1536xbf16, #tpu.memory_space<vmem>>, %arg3: memref<1x384xf32, #tpu.memory_space<vmem>>, %arg4: memref<384x4xbf16, #tpu.memory_space<vmem>>, %arg5: memref<1x4xf32, #tpu.memory_space<vmem>>, %arg6: memref<8x4xf32, #tpu.memory_space<vmem>>) attributes {dimension_semantics = [#tpu.dimension_semantics<parallel>], iteration_bounds = array<i64: 1>, scalar_prefetch = 0 : i64, scratch_operands = 0 : i64, tpu.core_type = #tpu.core_type<tc>, window_params = [{transform_indices = @transform_0, window_bounds = array<i64: 8, 16, 32>}, {pipeline_mode = #tpu.pipeline_mode<synchronous>, transform_indices = @transform_1, window_bounds = array<i64: 32, 1536>}, {pipeline_mode = #tpu.pipeline_mode<synchronous>, transform_indices = @transform_2, window_bounds = array<i64: 1, 384>}, {pipeline_mode = #tpu.pipeline_mode<synchronous>, transform_indices = @transform_3, window_bounds = array<i64: 384, 4>}, {pipeline_mode = #tpu.pipeline_mode<synchronous>, transform_indices = @transform_4, window_bounds = array<i64: 1, 4>}, {transform_indices = @transform_5, window_bounds = array<i64: 8, 4>}]} {
    %c0 = arith.constant 0 : index
    %c0_0 = arith.constant 0 : index
    %c0_1 = arith.constant 0 : index
    %0 = vector.load %arg1[%c0, %c0_0, %c0_1] : memref<8x16x32xbf16, #tpu.memory_space<vmem>>, vector<8x16x32xbf16>
    %1 = vector.shape_cast %0 : vector<8x16x32xbf16> to vector<128x32xbf16>
    %c0_2 = arith.constant 0 : index
    %c0_3 = arith.constant 0 : index
    %2 = vector.load %arg2[%c0_2, %c0_3] : memref<32x1536xbf16, #tpu.memory_space<vmem>>, vector<32x1536xbf16>
    %cst = arith.constant dense<0.000000e+00> : vector<128x1536xf32>
    %3 = tpu.matmul %1, %2, %cst {dimension_numbers = #tpu.dot_dimension_numbers<[1], [0], [0], [1], [0, 0, 1, 1], [], []>} : vector<128x32xbf16>, vector<32x1536xbf16>, vector<128x1536xf32> -> vector<128x1536xf32>
    %4 = tpu.iota {dimensions = array<i32: 1>} : vector<1x16x128xi32>
    %5 = vector.extract_strided_slice %3 {offsets = [0, 0], sizes = [128, 128], strides = [1, 1]} : vector<128x1536xf32> to vector<128x128xf32>
    %6 = vector.extract_strided_slice %3 {offsets = [0, 128], sizes = [128, 128], strides = [1, 1]} : vector<128x1536xf32> to vector<128x128xf32>
    %c127_i32 = arith.constant 127 : i32
    %7 = tpu.dynamic_rotate %6 by %c127_i32 dim 0 : vector<128x128xf32>, i32 -> vector<128x128xf32>
    %8 = arith.addf %5, %7 : vector<128x128xf32>
    %9 = vector.extract_strided_slice %3 {offsets = [0, 256], sizes = [128, 128], strides = [1, 1]} : vector<128x1536xf32> to vector<128x128xf32>
    %c126_i32 = arith.constant 126 : i32
    %10 = tpu.dynamic_rotate %9 by %c126_i32 dim 0 : vector<128x128xf32>, i32 -> vector<128x128xf32>
    %11 = arith.addf %8, %10 : vector<128x128xf32>
    %12 = vector.shape_cast %11 : vector<128x128xf32> to vector<8x16x128xf32>
    %c14_i32 = arith.constant 14 : i32
    %13 = vector.broadcast %c14_i32 : i32 to vector<1x16x128xi32>
    %14 = arith.cmpi slt, %4, %13 : vector<1x16x128xi32>
    %cst_4 = arith.constant 0xFF800000 : f32
    %15 = vector.shape_cast %14 : vector<1x16x128xi1> to vector<1x16x128xi1>
    %16 = vector.broadcast %15 : vector<1x16x128xi1> to vector<8x16x128xi1>
    %17 = vector.broadcast %cst_4 : f32 to vector<8x16x128xf32>
    %18 = arith.select %16, %12, %17 : vector<8x16x128xi1>, vector<8x16x128xf32>
    %cst_5 = arith.constant dense<0xFF800000> : vector<8x128xf32>
    %19 = vector.multi_reduction <maximumf>, %18, %cst_5 [1] : vector<8x16x128xf32> to vector<8x128xf32>
    %20 = vector.extract_strided_slice %3 {offsets = [0, 384], sizes = [128, 128], strides = [1, 1]} : vector<128x1536xf32> to vector<128x128xf32>
    %21 = vector.extract_strided_slice %3 {offsets = [0, 512], sizes = [128, 128], strides = [1, 1]} : vector<128x1536xf32> to vector<128x128xf32>
    %c127_i32_6 = arith.constant 127 : i32
    %22 = tpu.dynamic_rotate %21 by %c127_i32_6 dim 0 : vector<128x128xf32>, i32 -> vector<128x128xf32>
    %23 = arith.addf %20, %22 : vector<128x128xf32>
    %24 = vector.extract_strided_slice %3 {offsets = [0, 640], sizes = [128, 128], strides = [1, 1]} : vector<128x1536xf32> to vector<128x128xf32>
    %c126_i32_7 = arith.constant 126 : i32
    %25 = tpu.dynamic_rotate %24 by %c126_i32_7 dim 0 : vector<128x128xf32>, i32 -> vector<128x128xf32>
    %26 = arith.addf %23, %25 : vector<128x128xf32>
    %27 = vector.extract_strided_slice %3 {offsets = [0, 768], sizes = [128, 128], strides = [1, 1]} : vector<128x1536xf32> to vector<128x128xf32>
    %c125_i32 = arith.constant 125 : i32
    %28 = tpu.dynamic_rotate %27 by %c125_i32 dim 0 : vector<128x128xf32>, i32 -> vector<128x128xf32>
    %29 = arith.addf %26, %28 : vector<128x128xf32>
    %30 = vector.shape_cast %29 : vector<128x128xf32> to vector<8x16x128xf32>
    %c13_i32 = arith.constant 13 : i32
    %31 = vector.broadcast %c13_i32 : i32 to vector<1x16x128xi32>
    %32 = arith.cmpi slt, %4, %31 : vector<1x16x128xi32>
    %cst_8 = arith.constant 0xFF800000 : f32
    %33 = vector.shape_cast %32 : vector<1x16x128xi1> to vector<1x16x128xi1>
    %34 = vector.broadcast %33 : vector<1x16x128xi1> to vector<8x16x128xi1>
    %35 = vector.broadcast %cst_8 : f32 to vector<8x16x128xf32>
    %36 = arith.select %34, %30, %35 : vector<8x16x128xi1>, vector<8x16x128xf32>
    %cst_9 = arith.constant dense<0xFF800000> : vector<8x128xf32>
    %37 = vector.multi_reduction <maximumf>, %36, %cst_9 [1] : vector<8x16x128xf32> to vector<8x128xf32>
    %38 = vector.extract_strided_slice %3 {offsets = [0, 896], sizes = [128, 128], strides = [1, 1]} : vector<128x1536xf32> to vector<128x128xf32>
    %39 = vector.extract_strided_slice %3 {offsets = [0, 1024], sizes = [128, 128], strides = [1, 1]} : vector<128x1536xf32> to vector<128x128xf32>
    %c127_i32_10 = arith.constant 127 : i32
    %40 = tpu.dynamic_rotate %39 by %c127_i32_10 dim 0 : vector<128x128xf32>, i32 -> vector<128x128xf32>
    %41 = arith.addf %38, %40 : vector<128x128xf32>
    %42 = vector.extract_strided_slice %3 {offsets = [0, 1152], sizes = [128, 128], strides = [1, 1]} : vector<128x1536xf32> to vector<128x128xf32>
    %c126_i32_11 = arith.constant 126 : i32
    %43 = tpu.dynamic_rotate %42 by %c126_i32_11 dim 0 : vector<128x128xf32>, i32 -> vector<128x128xf32>
    %44 = arith.addf %41, %43 : vector<128x128xf32>
    %45 = vector.extract_strided_slice %3 {offsets = [0, 1280], sizes = [128, 128], strides = [1, 1]} : vector<128x1536xf32> to vector<128x128xf32>
    %c125_i32_12 = arith.constant 125 : i32
    %46 = tpu.dynamic_rotate %45 by %c125_i32_12 dim 0 : vector<128x128xf32>, i32 -> vector<128x128xf32>
    %47 = arith.addf %44, %46 : vector<128x128xf32>
    %48 = vector.extract_strided_slice %3 {offsets = [0, 1408], sizes = [128, 128], strides = [1, 1]} : vector<128x1536xf32> to vector<128x128xf32>
    %c124_i32 = arith.constant 124 : i32
    %49 = tpu.dynamic_rotate %48 by %c124_i32 dim 0 : vector<128x128xf32>, i32 -> vector<128x128xf32>
    %50 = arith.addf %47, %49 : vector<128x128xf32>
    %51 = vector.shape_cast %50 : vector<128x128xf32> to vector<8x16x128xf32>
    %c12_i32 = arith.constant 12 : i32
    %52 = vector.broadcast %c12_i32 : i32 to vector<1x16x128xi32>
    %53 = arith.cmpi slt, %4, %52 : vector<1x16x128xi32>
    %cst_13 = arith.constant 0xFF800000 : f32
    %54 = vector.shape_cast %53 : vector<1x16x128xi1> to vector<1x16x128xi1>
    %55 = vector.broadcast %54 : vector<1x16x128xi1> to vector<8x16x128xi1>
    %56 = vector.broadcast %cst_13 : f32 to vector<8x16x128xf32>
    %57 = arith.select %55, %51, %56 : vector<8x16x128xi1>, vector<8x16x128xf32>
    %cst_14 = arith.constant dense<0xFF800000> : vector<8x128xf32>
    %58 = vector.multi_reduction <maximumf>, %57, %cst_14 [1] : vector<8x16x128xf32> to vector<8x128xf32>
    %59 = tpu.concatenate %19, %37, %58 in 1 : vector<8x128xf32>, vector<8x128xf32>, vector<8x128xf32> -> vector<8x384xf32>
    %c0_15 = arith.constant 0 : index
    %c0_16 = arith.constant 0 : index
    %60 = vector.load %arg3[%c0_15, %c0_16] : memref<1x384xf32, #tpu.memory_space<vmem>>, vector<1x384xf32>
    %61 = vector.broadcast %60 : vector<1x384xf32> to vector<8x384xf32>
    %62 = arith.addf %59, %61 : vector<8x384xf32>
    %cst_17 = arith.constant 0.000000e+00 : f32
    %63 = vector.broadcast %cst_17 : f32 to vector<8x384xf32>
    %64 = arith.maximumf %62, %63 : vector<8x384xf32>
    %65 = arith.truncf %64 : vector<8x384xf32> to vector<8x384xbf16>
    %c0_18 = arith.constant 0 : index
    %c0_19 = arith.constant 0 : index
    %66 = vector.load %arg4[%c0_18, %c0_19] : memref<384x4xbf16, #tpu.memory_space<vmem>>, vector<384x4xbf16>
    %cst_20 = arith.constant dense<0.000000e+00> : vector<8x4xf32>
    %67 = tpu.matmul %65, %66, %cst_20 {dimension_numbers = #tpu.dot_dimension_numbers<[1], [0], [0], [1], [0, 0, 1, 1], [], []>} : vector<8x384xbf16>, vector<384x4xbf16>, vector<8x4xf32> -> vector<8x4xf32>
    %c0_21 = arith.constant 0 : index
    %c0_22 = arith.constant 0 : index
    %68 = vector.load %arg5[%c0_21, %c0_22] : memref<1x4xf32, #tpu.memory_space<vmem>>, vector<1x4xf32>
    %69 = vector.broadcast %68 : vector<1x4xf32> to vector<8x4xf32>
    %70 = arith.addf %67, %69 : vector<8x4xf32>
    %c0_23 = arith.constant 0 : index
    %c0_24 = arith.constant 0 : index
    %71 = vector.load %arg6[%c0_23, %c0_24] : memref<8x4xf32, #tpu.memory_space<vmem>>, vector<8x4xf32>
    tpu.vector_store %arg6[%c0_23, %c0_24], %70 {strides = array<i32>} : memref<8x4xf32, #tpu.memory_space<vmem>>, vector<8x4xf32>,
    return
  }
  func.func @transform_0(%arg0: i32) -> (i32, i32, i32) {
    %c0_i32 = arith.constant 0 : i32
    %c0_i32_0 = arith.constant 0 : i32
    %c0_i32_1 = arith.constant 0 : i32
    return %arg0, %c0_i32, %c0_i32_0 : i32, i32, i32
  }
  func.func @transform_1(%arg0: i32) -> (i32, i32) {
    %c0_i32 = arith.constant 0 : i32
    %c0_i32_0 = arith.constant 0 : i32
    %c0_i32_1 = arith.constant 0 : i32
    return %c0_i32, %c0_i32_0 : i32, i32
  }
  func.func @transform_2(%arg0: i32) -> (i32, i32) {
    %c0_i32 = arith.constant 0 : i32
    %c0_i32_0 = arith.constant 0 : i32
    %c0_i32_1 = arith.constant 0 : i32
    return %c0_i32, %c0_i32_0 : i32, i32
  }
  func.func @transform_3(%arg0: i32) -> (i32, i32) {
    %c0_i32 = arith.constant 0 : i32
    %c0_i32_0 = arith.constant 0 : i32
    %c0_i32_1 = arith.constant 0 : i32
    return %c0_i32, %c0_i32_0 : i32, i32
  }
  func.func @transform_4(%arg0: i32) -> (i32, i32) {
    %c0_i32 = arith.constant 0 : i32
    %c0_i32_0 = arith.constant 0 : i32
    %c0_i32_1 = arith.constant 0 : i32
    return %c0_i32, %c0_i32_0 : i32, i32
  }
  func.func @transform_5(%arg0: i32) -> (i32, i32) {
    %c0_i32 = arith.constant 0 : i32
    %c0_i32_0 = arith.constant 0 : i32
    return %arg0, %c0_i32 : i32, i32
  }
}

</mosaic_0001>

<llo_original>
// kernel: tpu_custom_call.1
$region0: #{tpu_custom_call.1}
  #allocation0 [shape = 'u32[]', space=smem, size = 0x4, offset = 0x4, fixed_abs, tag = 'smem constant byte address 0x4 - core index']
  #allocation1 [shape = 'u32[72,128]{1,0:T(1,128)}', space=vmem, size = 0x9000, scoped, tag = 'internal scratch']
  %s0 = inlined_call_operand.hbm [shape: bf16[8,16,32], index: 0, kind: input, shape index: {}]
  %s1 = inlined_call_operand.vmem [shape: bf16[32,1536], index: 1, kind: input, shape index: {}]
  %s2 = inlined_call_operand.vmem [shape: f32[1,384], index: 2, kind: input, shape index: {}]
  %s3 = inlined_call_operand.vmem [shape: bf16[384,4], index: 3, kind: input, shape index: {}]
  %s4 = inlined_call_operand.vmem [shape: f32[1,4], index: 4, kind: input, shape index: {}]
  %s5 = inlined_call_operand.vmem [shape: f32[8,4], index: 5, kind: output, shape index: {}]
  %s6 = sld [smem:[#allocation0]]
  $region34: #{tpu_custom_call.1} parent=0
    _
  %s8 = ssub.s32 1, %s6
  %s9 = scalar_select 0, %s8, %s6
  $region1: #{tpu_custom_call.1} parent=0
    #allocation2 [shape = 'u8[32768]{0}', space=vmem, size = 0x8000, scoped, tag = 'input window, operand 0, single buffered']
    #allocation3 [shape = 's32[1]{0}', space=sflag, size = 0x4, scoped, tag = 'scoped memory for tpu_custom_call.1']
    %10 = vsyncpa [#allocation3], 0
    // Predicated region
    $region2: #{tpu_custom_call.1} parent=1 // pred_check
      _
    $region3: #{tpu_custom_call.1} parent=1 // pred_check_branch
      %12 = sbr.rel (0) target = $region5
    $region4: #{tpu_custom_call.1} parent=1 // pred_region
      %14 = vsyncadd [#allocation3], 0
      %s15 = sshll.u32 %s0, 4
      %s16 = int_to_ptr.hbm [resolvable:$true] %s15
      %s17 = sshll.u32 [#allocation2], 4
      %s18 = int_to_ptr.vmem [resolvable:$true] %s17
      %23 = dma.hbm_to_vmem [thread:$0]  %s16, 1024, %s18, [#allocation3], 64, 64, 4
    $region5: #{tpu_custom_call.1} parent=1 // pred_fallthru
      _
    // Predicated region
    $region6: #{tpu_custom_call.1} parent=1 // pred_check
      _
    $region7: #{tpu_custom_call.1} parent=1 // pred_check_branch
      %25 = sbr.rel (0) target = $region9
    $region8: #{tpu_custom_call.1} parent=1 // pred_region
      _
    $region9: #{tpu_custom_call.1} parent=1 // pred_fallthru
      _
    // Predicated region
    $region10: #{tpu_custom_call.1} parent=1 // pred_check
      _
    $region11: #{tpu_custom_call.1} parent=1 // pred_check_branch
      %27 = sbr.rel (0) target = $region13
    $region12: #{tpu_custom_call.1} parent=1 // pred_region
      _
    $region13: #{tpu_custom_call.1} parent=1 // pred_fallthru
      _
    // Predicated region
    $region14: #{tpu_custom_call.1} parent=1 // pred_check
      _
    $region15: #{tpu_custom_call.1} parent=1 // pred_check_branch
      %29 = sbr.rel (0) target = $region17
    $region16: #{tpu_custom_call.1} parent=1 // pred_region
      _
    $region17: #{tpu_custom_call.1} parent=1 // pred_fallthru
      _
    // Predicated region
    $region18: #{tpu_custom_call.1} parent=1 // pred_check
      _
    $region19: #{tpu_custom_call.1} parent=1 // pred_check_branch
      %31 = sbr.rel (0) target = $region21
    $region20: #{tpu_custom_call.1} parent=1 // pred_region
      _
    $region21: #{tpu_custom_call.1} parent=1 // pred_fallthru
      _
    // Predicated region
    $region22: #{tpu_custom_call.1} parent=1 // pred_check
      _
    $region23: #{tpu_custom_call.1} parent=1 // pred_check_branch
      %33 = sbr.rel (0) target = $region25
    $region24: #{tpu_custom_call.1} parent=1 // pred_region
      %35 = dma.done [#allocation3], 1024
    $region25: #{tpu_custom_call.1} parent=1 // pred_fallthru
      _
    %v37 = vld [vmem:[#allocation2] sm:$0xf]
    %v38 = vld [vmem:[#allocation2 + $0x4] sm:$0xf]
    %v39 = vld [vmem:[#allocation2 + $0x8] sm:$0xf]
    %v40 = vld [vmem:[#allocation2 + $0xc] sm:$0xf]
    %v41 = vld [vmem:[#allocation2 + $0x10] sm:$0xf]
    %v42 = vld [vmem:[#allocation2 + $0x14] sm:$0xf]
    %v43 = vld [vmem:[#allocation2 + $0x18] sm:$0xf]
    %v44 = vld [vmem:[#allocation2 + $0x1c] sm:$0xf]
    %v45 = vld [vmem:[#allocation2 + $0x20] sm:$0xf]
    %v46 = vld [vmem:[#allocation2 + $0x24] sm:$0xf]
    %v47 = vld [vmem:[#allocation2 + $0x28] sm:$0xf]
    %v48 = vld [vmem:[#allocation2 + $0x2c] sm:$0xf]
    %v49 = vld [vmem:[#allocation2 + $0x30] sm:$0xf]
    %v50 = vld [vmem:[#allocation2 + $0x34] sm:$0xf]
    %v51 = vld [vmem:[#allocation2 + $0x38] sm:$0xf]
    %v52 = vld [vmem:[#allocation2 + $0x3c] sm:$0xf]
    %v53 = vld [vmem:[%s1] sm:$0xff]
    %v54 = vld [vmem:[%s1 + $0x8] sm:$0xff]
    %v55 = vld [vmem:[%s1 + $0x10] sm:$0xff]
    %v56 = vld [vmem:[%s1 + $0x18] sm:$0xff]
    %v57 = vld [vmem:[%s1 + $0x20] sm:$0xff]
    %v58 = vld [vmem:[%s1 + $0x28] sm:$0xff]
    %v59 = vld [vmem:[%s1 + $0x30] sm:$0xff]
    %v60 = vld [vmem:[%s1 + $0x38] sm:$0xff]
    %v61 = vld [vmem:[%s1 + $0x40] sm:$0xff]
    %v62 = vld [vmem:[%s1 + $0x48] sm:$0xff]
    %v63 = vld [vmem:[%s1 + $0x50] sm:$0xff]
    %v64 = vld [vmem:[%s1 + $0x58] sm:$0xff]
    %v65 = vld [vmem:[%s1 + $0x60] sm:$0xff]
    %v66 = vld [vmem:[%s1 + $0x68] sm:$0xff]
    %v67 = vld [vmem:[%s1 + $0x70] sm:$0xff]
    %v68 = vld [vmem:[%s1 + $0x78] sm:$0xff]
    %v69 = vld [vmem:[%s1 + $0x80] sm:$0xff]
    %v70 = vld [vmem:[%s1 + $0x88] sm:$0xff]
    %v71 = vld [vmem:[%s1 + $0x90] sm:$0xff]
    %v72 = vld [vmem:[%s1 + $0x98] sm:$0xff]
    %v73 = vld [vmem:[%s1 + $0xa0] sm:$0xff]
    %v74 = vld [vmem:[%s1 + $0xa8] sm:$0xff]
    %v75 = vld [vmem:[%s1 + $0xb0] sm:$0xff]
    %v76 = vld [vmem:[%s1 + $0xb8] sm:$0xff]
    %v93 = vunpack.c.l.b16 %v37
    %v94 = vunpack.c.l.b16 %v38
    %v95 = vunpack.c.l.b16 %v39
    %v96 = vunpack.c.l.b16 %v40
    %v97 = vunpack.c.l.b16 %v41
    %v98 = vunpack.c.l.b16 %v42
    %v99 = vunpack.c.l.b16 %v43
    %v100 = vunpack.c.l.b16 %v44
    %v101 = vunpack.c.l.b16 %v45
    %v102 = vunpack.c.l.b16 %v46
    %v103 = vunpack.c.l.b16 %v47
    %v104 = vunpack.c.l.b16 %v48
    %v105 = vunpack.c.l.b16 %v49
    %v106 = vunpack.c.l.b16 %v50
    %v107 = vunpack.c.l.b16 %v51
    %v108 = vunpack.c.l.b16 %v52
    %v109 = vpack.c.b16 %v94, %v93
    %v110 = vpack.c.b16 %v96, %v95
    %v111 = vpack.c.b16 %v98, %v97
    %v112 = vpack.c.b16 %v100, %v99
    %v113 = vpack.c.b16 %v102, %v101
    %v114 = vpack.c.b16 %v104, %v103
    %v115 = vpack.c.b16 %v106, %v105
    %v116 = vpack.c.b16 %v108, %v107
    %v141 = vunpack.c.l.b16 %v53
    %v142 = vunpack.c.h.b16 %v53
    %v143 = vunpack.c.l.b16 %v54
    %v144 = vunpack.c.h.b16 %v54
    %v145 = vunpack.c.l.b16 %v55
    %v146 = vunpack.c.h.b16 %v55
    %v147 = vunpack.c.l.b16 %v56
    %v148 = vunpack.c.h.b16 %v56
    %v149 = vunpack.c.l.b16 %v57
    %v150 = vunpack.c.h.b16 %v57
    %v151 = vunpack.c.l.b16 %v58
    %v152 = vunpack.c.h.b16 %v58
    %v153 = vunpack.c.l.b16 %v59
    %v154 = vunpack.c.h.b16 %v59
    %v155 = vunpack.c.l.b16 %v60
    %v156 = vunpack.c.h.b16 %v60
    %v157 = vunpack.c.l.b16 %v61
    %v158 = vunpack.c.h.b16 %v61
    %v159 = vunpack.c.l.b16 %v62
    %v160 = vunpack.c.h.b16 %v62
    %v161 = vunpack.c.l.b16 %v63
    %v162 = vunpack.c.h.b16 %v63
    %v163 = vunpack.c.l.b16 %v64
    %v164 = vunpack.c.h.b16 %v64
    %v165 = vunpack.c.l.b16 %v65
    %v166 = vunpack.c.h.b16 %v65
    %v167 = vunpack.c.l.b16 %v66
    %v168 = vunpack.c.h.b16 %v66
    %v169 = vunpack.c.l.b16 %v67
    %v170 = vunpack.c.h.b16 %v67
    %v171 = vunpack.c.l.b16 %v68
    %v172 = vunpack.c.h.b16 %v68
    %v173 = vunpack.c.l.b16 %v69
    %v174 = vunpack.c.h.b16 %v69
    %v175 = vunpack.c.l.b16 %v70
    %v176 = vunpack.c.h.b16 %v70
    %v177 = vunpack.c.l.b16 %v71
    %v178 = vunpack.c.h.b16 %v71
    %v179 = vunpack.c.l.b16 %v72
    %v180 = vunpack.c.h.b16 %v72
    %v181 = vunpack.c.l.b16 %v73
    %v182 = vunpack.c.h.b16 %v73
    %v183 = vunpack.c.l.b16 %v74
    %v184 = vunpack.c.h.b16 %v74
    %v185 = vunpack.c.l.b16 %v75
    %v186 = vunpack.c.h.b16 %v75
    %v187 = vunpack.c.l.b16 %v76
    %v188 = vunpack.c.h.b16 %v76
    %v189 = vpack.c.b16 %v153, %v141
    %v190 = vpack.c.b16 %v154, %v142
    %v191 = vpack.c.b16 %v155, %v143
    %v192 = vpack.c.b16 %v156, %v144
    %v193 = vpack.c.b16 %v157, %v145
    %v194 = vpack.c.b16 %v158, %v146
    %v195 = vpack.c.b16 %v159, %v147
    %v196 = vpack.c.b16 %v160, %v148
    %v197 = vpack.c.b16 %v161, %v149
    %v198 = vpack.c.b16 %v162, %v150
    %v199 = vpack.c.b16 %v163, %v151
    %v200 = vpack.c.b16 %v164, %v152
    %v201 = vpack.c.b16 %v177, %v165
    %v202 = vpack.c.b16 %v178, %v166
    %v203 = vpack.c.b16 %v179, %v167
    %v204 = vpack.c.b16 %v180, %v168
    %v205 = vpack.c.b16 %v181, %v169
    %v206 = vpack.c.b16 %v182, %v170
    %v207 = vpack.c.b16 %v183, %v171
    %v208 = vpack.c.b16 %v184, %v172
    %v209 = vpack.c.b16 %v185, %v173
    %v210 = vpack.c.b16 %v186, %v174
    %v211 = vpack.c.b16 %v187, %v175
    %v212 = vpack.c.b16 %v188, %v176
    %vm237 = vcmask 261120
    %v239 = vsel %vm237, %v109, 0
    %v242 = vsel %vm237, %v110, 0
    %v245 = vsel %vm237, %v111, 0
    %v248 = vsel %vm237, %v112, 0
    %v251 = vsel %vm237, %v113, 0
    %v254 = vsel %vm237, %v114, 0
    %v257 = vsel %vm237, %v115, 0
    %v260 = vsel %vm237, %v116, 0
    %262 = vmatpush.bf16.msra.mxu0 0
    %263 = vmatpush.bf16.msra.mxu0 0
    %264 = vmatpush.bf16.msra.mxu0 0
    %265 = vmatpush.bf16.msra.mxu0 0
    %266 = vmatpush.bf16.msra.mxu0 0
    %267 = vmatpush.bf16.msra.mxu0 0
    %268 = vmatpush.bf16.msra.mxu0 %v201
    %269 = vmatpush.bf16.msra.mxu0 %v189
    %270 = vmatmul.bf16.gmra.mxu0 %v239
    %v271 = vpop.f32.mrf.mxu0
    %v272 = vadd.f32 0.0, %v271
    %v273 = vpop.f32.mrf.mxu0
    %v274 = vadd.f32 0.0, %v273
    %275 = vmatmul.bf16.gmra.mxu0 %v242
    %v276 = vpop.f32.mrf.mxu0
    %v277 = vadd.f32 0.0, %v276
    %v278 = vpop.f32.mrf.mxu0
    %v279 = vadd.f32 0.0, %v278
    %280 = vmatmul.bf16.gmra.mxu0 %v245
    %v281 = vpop.f32.mrf.mxu0
    %v282 = vadd.f32 0.0, %v281
    %v283 = vpop.f32.mrf.mxu0
    %v284 = vadd.f32 0.0, %v283
    %285 = vmatmul.bf16.gmra.mxu0 %v248
    %v286 = vpop.f32.mrf.mxu0
    %v287 = vadd.f32 0.0, %v286
    %v288 = vpop.f32.mrf.mxu0
    %v289 = vadd.f32 0.0, %v288
    %290 = vmatmul.bf16.gmra.mxu0 %v251
    %v291 = vpop.f32.mrf.mxu0
    %v292 = vadd.f32 0.0, %v291
    %v293 = vpop.f32.mrf.mxu0
    %v294 = vadd.f32 0.0, %v293
    %295 = vmatmul.bf16.gmra.mxu0 %v254
    %v296 = vpop.f32.mrf.mxu0
    %v297 = vadd.f32 0.0, %v296
    %v298 = vpop.f32.mrf.mxu0
    %v299 = vadd.f32 0.0, %v298
    %300 = vmatmul.bf16.gmra.mxu0 %v257
    %v301 = vpop.f32.mrf.mxu0
    %v302 = vadd.f32 0.0, %v301
    %v303 = vpop.f32.mrf.mxu0
    %v304 = vadd.f32 0.0, %v303
    %305 = vmatmul.bf16.gmra.mxu0 %v260
    %v306 = vpop.f32.mrf.mxu0
    %v307 = vadd.f32 0.0, %v306
    %v308 = vpop.f32.mrf.mxu0
    %v309 = vadd.f32 0.0, %v308
    %310 = vdwg.mxu0
    %311 = vmatpush.bf16.msra.mxu0 0
    %312 = vmatpush.bf16.msra.mxu0 0
    %313 = vmatpush.bf16.msra.mxu0 0
    %314 = vmatpush.bf16.msra.mxu0 0
    %315 = vmatpush.bf16.msra.mxu0 0
    %316 = vmatpush.bf16.msra.mxu0 0
    %317 = vmatpush.bf16.msra.mxu0 %v202
    %318 = vmatpush.bf16.msra.mxu0 %v190
    %319 = vmatmul.bf16.gmra.mxu0 %v239
    %v320 = vpop.f32.mrf.mxu0
    %v321 = vadd.f32 0.0, %v320
    %v322 = vpop.f32.mrf.mxu0
    %v323 = vadd.f32 0.0, %v322
    %324 = vmatmul.bf16.gmra.mxu0 %v242
    %v325 = vpop.f32.mrf.mxu0
    %v326 = vadd.f32 0.0, %v325
    %v327 = vpop.f32.mrf.mxu0
    %v328 = vadd.f32 0.0, %v327
    %329 = vmatmul.bf16.gmra.mxu0 %v245
    %v330 = vpop.f32.mrf.mxu0
    %v331 = vadd.f32 0.0, %v330
    %v332 = vpop.f32.mrf.mxu0
    %v333 = vadd.f32 0.0, %v332
    %334 = vmatmul.bf16.gmra.mxu0 %v248
    %v335 = vpop.f32.mrf.mxu0
    %v336 = vadd.f32 0.0, %v335
    %v337 = vpop.f32.mrf.mxu0
    %v338 = vadd.f32 0.0, %v337
    %339 = vmatmul.bf16.gmra.mxu0 %v251
    %v340 = vpop.f32.mrf.mxu0
    %v341 = vadd.f32 0.0, %v340
    %v342 = vpop.f32.mrf.mxu0
    %v343 = vadd.f32 0.0, %v342
    %344 = vmatmul.bf16.gmra.mxu0 %v254
    %v345 = vpop.f32.mrf.mxu0
    %v346 = vadd.f32 0.0, %v345
    %v347 = vpop.f32.mrf.mxu0
    %v348 = vadd.f32 0.0, %v347
    %349 = vmatmul.bf16.gmra.mxu0 %v257
    %v350 = vpop.f32.mrf.mxu0
    %v351 = vadd.f32 0.0, %v350
    %v352 = vpop.f32.mrf.mxu0
    %v353 = vadd.f32 0.0, %v352
    %354 = vmatmul.bf16.gmra.mxu0 %v260
    %v355 = vpop.f32.mrf.mxu0
    %v356 = vadd.f32 0.0, %v355
    %v357 = vpop.f32.mrf.mxu0
    %v358 = vadd.f32 0.0, %v357
    %359 = vdwg.mxu0
    %360 = vmatpush.bf16.msra.mxu0 0
    %361 = vmatpush.bf16.msra.mxu0 0
    %362 = vmatpush.bf16.msra.mxu0 0
    %363 = vmatpush.bf16.msra.mxu0 0
    %364 = vmatpush.bf16.msra.mxu0 0
    %365 = vmatpush.bf16.msra.mxu0 0
    %366 = vmatpush.bf16.msra.mxu0 %v203
    %367 = vmatpush.bf16.msra.mxu0 %v191
    %368 = vmatmul.bf16.gmra.mxu0 %v239
    %v369 = vpop.f32.mrf.mxu0
    %v370 = vadd.f32 0.0, %v369
    %v371 = vpop.f32.mrf.mxu0
    %v372 = vadd.f32 0.0, %v371
    %373 = vmatmul.bf16.gmra.mxu0 %v242
    %v374 = vpop.f32.mrf.mxu0
    %v375 = vadd.f32 0.0, %v374
    %v376 = vpop.f32.mrf.mxu0
    %v377 = vadd.f32 0.0, %v376
    %378 = vmatmul.bf16.gmra.mxu0 %v245
    %v379 = vpop.f32.mrf.mxu0
    %v380 = vadd.f32 0.0, %v379
    %v381 = vpop.f32.mrf.mxu0
    %v382 = vadd.f32 0.0, %v381
    %383 = vmatmul.bf16.gmra.mxu0 %v248
    %v384 = vpop.f32.mrf.mxu0
    %v385 = vadd.f32 0.0, %v384
    %v386 = vpop.f32.mrf.mxu0
    %v387 = vadd.f32 0.0, %v386
    %388 = vmatmul.bf16.gmra.mxu0 %v251
    %v389 = vpop.f32.mrf.mxu0
    %v390 = vadd.f32 0.0, %v389
    %v391 = vpop.f32.mrf.mxu0
    %v392 = vadd.f32 0.0, %v391
    %393 = vmatmul.bf16.gmra.mxu0 %v254
    %v394 = vpop.f32.mrf.mxu0
    %v395 = vadd.f32 0.0, %v394
    %v396 = vpop.f32.mrf.mxu0
    %v397 = vadd.f32 0.0, %v396
    %398 = vmatmul.bf16.gmra.mxu0 %v257
    %v399 = vpop.f32.mrf.mxu0
    %v400 = vadd.f32 0.0, %v399
    %v401 = vpop.f32.mrf.mxu0
    %v402 = vadd.f32 0.0, %v401
    %403 = vmatmul.bf16.gmra.mxu0 %v260
    %v404 = vpop.f32.mrf.mxu0
    %v405 = vadd.f32 0.0, %v404
    %v406 = vpop.f32.mrf.mxu0
    %v407 = vadd.f32 0.0, %v406
    %408 = vdwg.mxu0
    %409 = vmatpush.bf16.msra.mxu0 0
    %410 = vmatpush.bf16.msra.mxu0 0
    %411 = vmatpush.bf16.msra.mxu0 0
    %412 = vmatpush.bf16.msra.mxu0 0
    %413 = vmatpush.bf16.msra.mxu0 0
    %414 = vmatpush.bf16.msra.mxu0 0
    %415 = vmatpush.bf16.msra.mxu0 %v204
    %416 = vmatpush.bf16.msra.mxu0 %v192
    %417 = vmatmul.bf16.gmra.mxu0 %v239
    %v418 = vpop.f32.mrf.mxu0
    %v419 = vadd.f32 0.0, %v418
    %v420 = vpop.f32.mrf.mxu0
    %v421 = vadd.f32 0.0, %v420
    %422 = vmatmul.bf16.gmra.mxu0 %v242
    %v423 = vpop.f32.mrf.mxu0
    %v424 = vadd.f32 0.0, %v423
    %v425 = vpop.f32.mrf.mxu0
    %v426 = vadd.f32 0.0, %v425
    %427 = vmatmul.bf16.gmra.mxu0 %v245
    %v428 = vpop.f32.mrf.mxu0
    %v429 = vadd.f32 0.0, %v428
    %v430 = vpop.f32.mrf.mxu0
    %v431 = vadd.f32 0.0, %v430
    %432 = vmatmul.bf16.gmra.mxu0 %v248
    %v433 = vpop.f32.mrf.mxu0
    %v434 = vadd.f32 0.0, %v433
    %v435 = vpop.f32.mrf.mxu0
    %v436 = vadd.f32 0.0, %v435
    %437 = vmatmul.bf16.gmra.mxu0 %v251
    %v438 = vpop.f32.mrf.mxu0
    %v439 = vadd.f32 0.0, %v438
    %v440 = vpop.f32.mrf.mxu0
    %v441 = vadd.f32 0.0, %v440
    %442 = vmatmul.bf16.gmra.mxu0 %v254
    %v443 = vpop.f32.mrf.mxu0
    %v444 = vadd.f32 0.0, %v443
    %v445 = vpop.f32.mrf.mxu0
    %v446 = vadd.f32 0.0, %v445
    %447 = vmatmul.bf16.gmra.mxu0 %v257
    %v448 = vpop.f32.mrf.mxu0
    %v449 = vadd.f32 0.0, %v448
    %v450 = vpop.f32.mrf.mxu0
    %v451 = vadd.f32 0.0, %v450
    %452 = vmatmul.bf16.gmra.mxu0 %v260
    %v453 = vpop.f32.mrf.mxu0
    %v454 = vadd.f32 0.0, %v453
    %v455 = vpop.f32.mrf.mxu0
    %v456 = vadd.f32 0.0, %v455
    %457 = vdwg.mxu0
    %458 = vmatpush.bf16.msra.mxu0 0
    %459 = vmatpush.bf16.msra.mxu0 0
    %460 = vmatpush.bf16.msra.mxu0 0
    %461 = vmatpush.bf16.msra.mxu0 0
    %462 = vmatpush.bf16.msra.mxu0 0
    %463 = vmatpush.bf16.msra.mxu0 0
    %464 = vmatpush.bf16.msra.mxu0 %v205
    %465 = vmatpush.bf16.msra.mxu0 %v193
    %466 = vmatmul.bf16.gmra.mxu0 %v239
    %v467 = vpop.f32.mrf.mxu0
    %v468 = vadd.f32 0.0, %v467
    %v469 = vpop.f32.mrf.mxu0
    %v470 = vadd.f32 0.0, %v469
    %471 = vmatmul.bf16.gmra.mxu0 %v242
    %v472 = vpop.f32.mrf.mxu0
    %v473 = vadd.f32 0.0, %v472
    %v474 = vpop.f32.mrf.mxu0
    %v475 = vadd.f32 0.0, %v474
    %476 = vmatmul.bf16.gmra.mxu0 %v245
    %v477 = vpop.f32.mrf.mxu0
    %v478 = vadd.f32 0.0, %v477
    %v479 = vpop.f32.mrf.mxu0
    %v480 = vadd.f32 0.0, %v479
    %481 = vmatmul.bf16.gmra.mxu0 %v248
    %v482 = vpop.f32.mrf.mxu0
    %v483 = vadd.f32 0.0, %v482
    %v484 = vpop.f32.mrf.mxu0
    %v485 = vadd.f32 0.0, %v484
    %486 = vmatmul.bf16.gmra.mxu0 %v251
    %v487 = vpop.f32.mrf.mxu0
    %v488 = vadd.f32 0.0, %v487
    %v489 = vpop.f32.mrf.mxu0
    %v490 = vadd.f32 0.0, %v489
    %491 = vmatmul.bf16.gmra.mxu0 %v254
    %v492 = vpop.f32.mrf.mxu0
    %v493 = vadd.f32 0.0, %v492
    %v494 = vpop.f32.mrf.mxu0
    %v495 = vadd.f32 0.0, %v494
    %496 = vmatmul.bf16.gmra.mxu0 %v257
    %v497 = vpop.f32.mrf.mxu0
    %v498 = vadd.f32 0.0, %v497
    %v499 = vpop.f32.mrf.mxu0
    %v500 = vadd.f32 0.0, %v499
    %501 = vmatmul.bf16.gmra.mxu0 %v260
    %v502 = vpop.f32.mrf.mxu0
    %v503 = vadd.f32 0.0, %v502
    %v504 = vpop.f32.mrf.mxu0
    %v505 = vadd.f32 0.0, %v504
    %506 = vdwg.mxu0
    %507 = vmatpush.bf16.msra.mxu0 0
    %508 = vmatpush.bf16.msra.mxu0 0
    %509 = vmatpush.bf16.msra.mxu0 0
    %510 = vmatpush.bf16.msra.mxu0 0
    %511 = vmatpush.bf16.msra.mxu0 0
    %512 = vmatpush.bf16.msra.mxu0 0
    %513 = vmatpush.bf16.msra.mxu0 %v206
    %514 = vmatpush.bf16.msra.mxu0 %v194
    %515 = vmatmul.bf16.gmra.mxu0 %v239
    %v516 = vpop.f32.mrf.mxu0
    %v517 = vadd.f32 0.0, %v516
    %v518 = vpop.f32.mrf.mxu0
    %v519 = vadd.f32 0.0, %v518
    %520 = vmatmul.bf16.gmra.mxu0 %v242
    %v521 = vpop.f32.mrf.mxu0
    %v522 = vadd.f32 0.0, %v521
    %v523 = vpop.f32.mrf.mxu0
    %v524 = vadd.f32 0.0, %v523
    %525 = vmatmul.bf16.gmra.mxu0 %v245
    %v526 = vpop.f32.mrf.mxu0
    %v527 = vadd.f32 0.0, %v526
    %v528 = vpop.f32.mrf.mxu0
    %v529 = vadd.f32 0.0, %v528
    %530 = vmatmul.bf16.gmra.mxu0 %v248
    %v531 = vpop.f32.mrf.mxu0
    %v532 = vadd.f32 0.0, %v531
    %v533 = vpop.f32.mrf.mxu0
    %v534 = vadd.f32 0.0, %v533
    %535 = vmatmul.bf16.gmra.mxu0 %v251
    %v536 = vpop.f32.mrf.mxu0
    %v537 = vadd.f32 0.0, %v536
    %v538 = vpop.f32.mrf.mxu0
    %v539 = vadd.f32 0.0, %v538
    %540 = vmatmul.bf16.gmra.mxu0 %v254
    %v541 = vpop.f32.mrf.mxu0
    %v542 = vadd.f32 0.0, %v541
    %v543 = vpop.f32.mrf.mxu0
    %v544 = vadd.f32 0.0, %v543
    %545 = vmatmul.bf16.gmra.mxu0 %v257
    %v546 = vpop.f32.mrf.mxu0
    %v547 = vadd.f32 0.0, %v546
    %v548 = vpop.f32.mrf.mxu0
    %v549 = vadd.f32 0.0, %v548
    %550 = vmatmul.bf16.gmra.mxu0 %v260
    %v551 = vpop.f32.mrf.mxu0
    %v552 = vadd.f32 0.0, %v551
    %v553 = vpop.f32.mrf.mxu0
    %v554 = vadd.f32 0.0, %v553
    %555 = vdwg.mxu0
    %556 = vmatpush.bf16.msra.mxu0 0
    %557 = vmatpush.bf16.msra.mxu0 0
    %558 = vmatpush.bf16.msra.mxu0 0
    %559 = vmatpush.bf16.msra.mxu0 0
    %560 = vmatpush.bf16.msra.mxu0 0
    %561 = vmatpush.bf16.msra.mxu0 0
    %562 = vmatpush.bf16.msra.mxu0 %v207
    %563 = vmatpush.bf16.msra.mxu0 %v195
    %564 = vmatmul.bf16.gmra.mxu0 %v239
    %v565 = vpop.f32.mrf.mxu0
    %v566 = vadd.f32 0.0, %v565
    %v567 = vpop.f32.mrf.mxu0
    %v568 = vadd.f32 0.0, %v567
    %569 = vmatmul.bf16.gmra.mxu0 %v242
    %v570 = vpop.f32.mrf.mxu0
    %v571 = vadd.f32 0.0, %v570
    %v572 = vpop.f32.mrf.mxu0
    %v573 = vadd.f32 0.0, %v572
    %574 = vmatmul.bf16.gmra.mxu0 %v245
    %v575 = vpop.f32.mrf.mxu0
    %v576 = vadd.f32 0.0, %v575
    %v577 = vpop.f32.mrf.mxu0
    %v578 = vadd.f32 0.0, %v577
    %579 = vmatmul.bf16.gmra.mxu0 %v248
    %v580 = vpop.f32.mrf.mxu0
    %v581 = vadd.f32 0.0, %v580
    %v582 = vpop.f32.mrf.mxu0
    %v583 = vadd.f32 0.0, %v582
    %584 = vmatmul.bf16.gmra.mxu0 %v251
    %v585 = vpop.f32.mrf.mxu0
    %v586 = vadd.f32 0.0, %v585
    %v587 = vpop.f32.mrf.mxu0
    %v588 = vadd.f32 0.0, %v587
    %589 = vmatmul.bf16.gmra.mxu0 %v254
    %v590 = vpop.f32.mrf.mxu0
    %v591 = vadd.f32 0.0, %v590
    %v592 = vpop.f32.mrf.mxu0
    %v593 = vadd.f32 0.0, %v592
    %594 = vmatmul.bf16.gmra.mxu0 %v257
    %v595 = vpop.f32.mrf.mxu0
    %v596 = vadd.f32 0.0, %v595
    %v597 = vpop.f32.mrf.mxu0
    %v598 = vadd.f32 0.0, %v597
    %599 = vmatmul.bf16.gmra.mxu0 %v260
    %v600 = vpop.f32.mrf.mxu0
    %v601 = vadd.f32 0.0, %v600
    %v602 = vpop.f32.mrf.mxu0
    %v603 = vadd.f32 0.0, %v602
    %604 = vdwg.mxu0
    %605 = vmatpush.bf16.msra.mxu0 0
    %606 = vmatpush.bf16.msra.mxu0 0
    %607 = vmatpush.bf16.msra.mxu0 0
    %608 = vmatpush.bf16.msra.mxu0 0
    %609 = vmatpush.bf16.msra.mxu0 0
    %610 = vmatpush.bf16.msra.mxu0 0
    %611 = vmatpush.bf16.msra.mxu0 %v208
    %612 = vmatpush.bf16.msra.mxu0 %v196
    %613 = vmatmul.bf16.gmra.mxu0 %v239
    %v614 = vpop.f32.mrf.mxu0
    %v615 = vadd.f32 0.0, %v614
    %v616 = vpop.f32.mrf.mxu0
    %v617 = vadd.f32 0.0, %v616
    %618 = vmatmul.bf16.gmra.mxu0 %v242
    %v619 = vpop.f32.mrf.mxu0
    %v620 = vadd.f32 0.0, %v619
    %v621 = vpop.f32.mrf.mxu0
    %v622 = vadd.f32 0.0, %v621
    %623 = vmatmul.bf16.gmra.mxu0 %v245
    %v624 = vpop.f32.mrf.mxu0
    %v625 = vadd.f32 0.0, %v624
    %v626 = vpop.f32.mrf.mxu0
    %v627 = vadd.f32 0.0, %v626
    %628 = vmatmul.bf16.gmra.mxu0 %v248
    %v629 = vpop.f32.mrf.mxu0
    %v630 = vadd.f32 0.0, %v629
    %v631 = vpop.f32.mrf.mxu0
    %v632 = vadd.f32 0.0, %v631
    %633 = vmatmul.bf16.gmra.mxu0 %v251
    %v634 = vpop.f32.mrf.mxu0
    %v635 = vadd.f32 0.0, %v634
    %v636 = vpop.f32.mrf.mxu0
    %v637 = vadd.f32 0.0, %v636
    %638 = vmatmul.bf16.gmra.mxu0 %v254
    %v639 = vpop.f32.mrf.mxu0
    %v640 = vadd.f32 0.0, %v639
    %v641 = vpop.f32.mrf.mxu0
    %v642 = vadd.f32 0.0, %v641
    %643 = vmatmul.bf16.gmra.mxu0 %v257
    %v644 = vpop.f32.mrf.mxu0
    %v645 = vadd.f32 0.0, %v644
    %v646 = vpop.f32.mrf.mxu0
    %v647 = vadd.f32 0.0, %v646
    %648 = vmatmul.bf16.gmra.mxu0 %v260
    %v649 = vpop.f32.mrf.mxu0
    %v650 = vadd.f32 0.0, %v649
    %v651 = vpop.f32.mrf.mxu0
    %v652 = vadd.f32 0.0, %v651
    %653 = vdwg.mxu0
    %654 = vmatpush.bf16.msra.mxu0 0
    %655 = vmatpush.bf16.msra.mxu0 0
    %656 = vmatpush.bf16.msra.mxu0 0
    %657 = vmatpush.bf16.msra.mxu0 0
    %658 = vmatpush.bf16.msra.mxu0 0
    %659 = vmatpush.bf16.msra.mxu0 0
    %660 = vmatpush.bf16.msra.mxu0 %v209
    %661 = vmatpush.bf16.msra.mxu0 %v197
    %662 = vmatmul.bf16.gmra.mxu0 %v239
    %v663 = vpop.f32.mrf.mxu0
    %v664 = vadd.f32 0.0, %v663
    %v665 = vpop.f32.mrf.mxu0
    %v666 = vadd.f32 0.0, %v665
    %667 = vmatmul.bf16.gmra.mxu0 %v242
    %v668 = vpop.f32.mrf.mxu0
    %v669 = vadd.f32 0.0, %v668
    %v670 = vpop.f32.mrf.mxu0
    %v671 = vadd.f32 0.0, %v670
    %672 = vmatmul.bf16.gmra.mxu0 %v245
    %v673 = vpop.f32.mrf.mxu0
    %v674 = vadd.f32 0.0, %v673
    %v675 = vpop.f32.mrf.mxu0
    %v676 = vadd.f32 0.0, %v675
    %677 = vmatmul.bf16.gmra.mxu0 %v248
    %v678 = vpop.f32.mrf.mxu0
    %v679 = vadd.f32 0.0, %v678
    %v680 = vpop.f32.mrf.mxu0
    %v681 = vadd.f32 0.0, %v680
    %682 = vmatmul.bf16.gmra.mxu0 %v251
    %v683 = vpop.f32.mrf.mxu0
    %v684 = vadd.f32 0.0, %v683
    %v685 = vpop.f32.mrf.mxu0
    %v686 = vadd.f32 0.0, %v685
    %687 = vmatmul.bf16.gmra.mxu0 %v254
    %v688 = vpop.f32.mrf.mxu0
    %v689 = vadd.f32 0.0, %v688
    %v690 = vpop.f32.mrf.mxu0
    %v691 = vadd.f32 0.0, %v690
    %692 = vmatmul.bf16.gmra.mxu0 %v257
    %v693 = vpop.f32.mrf.mxu0
    %v694 = vadd.f32 0.0, %v693
    %v695 = vpop.f32.mrf.mxu0
    %v696 = vadd.f32 0.0, %v695
    %697 = vmatmul.bf16.gmra.mxu0 %v260
    %v698 = vpop.f32.mrf.mxu0
    %v699 = vadd.f32 0.0, %v698
    %v700 = vpop.f32.mrf.mxu0
    %v701 = vadd.f32 0.0, %v700
    %702 = vdwg.mxu0
    %703 = vmatpush.bf16.msra.mxu0 0
    %704 = vmatpush.bf16.msra.mxu0 0
    %705 = vmatpush.bf16.msra.mxu0 0
    %706 = vmatpush.bf16.msra.mxu0 0
    %707 = vmatpush.bf16.msra.mxu0 0
    %708 = vmatpush.bf16.msra.mxu0 0
    %709 = vmatpush.bf16.msra.mxu0 %v210
    %710 = vmatpush.bf16.msra.mxu0 %v198
    %711 = vmatmul.bf16.gmra.mxu0 %v239
    %v712 = vpop.f32.mrf.mxu0
    %v713 = vadd.f32 0.0, %v712
    %v714 = vpop.f32.mrf.mxu0
    %v715 = vadd.f32 0.0, %v714
    %716 = vmatmul.bf16.gmra.mxu0 %v242
    %v717 = vpop.f32.mrf.mxu0
    %v718 = vadd.f32 0.0, %v717
    %v719 = vpop.f32.mrf.mxu0
    %v720 = vadd.f32 0.0, %v719
    %721 = vmatmul.bf16.gmra.mxu0 %v245
    %v722 = vpop.f32.mrf.mxu0
    %v723 = vadd.f32 0.0, %v722
    %v724 = vpop.f32.mrf.mxu0
    %v725 = vadd.f32 0.0, %v724
    %726 = vmatmul.bf16.gmra.mxu0 %v248
    %v727 = vpop.f32.mrf.mxu0
    %v728 = vadd.f32 0.0, %v727
    %v729 = vpop.f32.mrf.mxu0
    %v730 = vadd.f32 0.0, %v729
    %731 = vmatmul.bf16.gmra.mxu0 %v251
    %v732 = vpop.f32.mrf.mxu0
    %v733 = vadd.f32 0.0, %v732
    %v734 = vpop.f32.mrf.mxu0
    %v735 = vadd.f32 0.0, %v734
    %736 = vmatmul.bf16.gmra.mxu0 %v254
    %v737 = vpop.f32.mrf.mxu0
    %v738 = vadd.f32 0.0, %v737
    %v739 = vpop.f32.mrf.mxu0
    %v740 = vadd.f32 0.0, %v739
    %741 = vmatmul.bf16.gmra.mxu0 %v257
    %v742 = vpop.f32.mrf.mxu0
    %v743 = vadd.f32 0.0, %v742
    %v744 = vpop.f32.mrf.mxu0
    %v745 = vadd.f32 0.0, %v744
    %746 = vmatmul.bf16.gmra.mxu0 %v260
    %v747 = vpop.f32.mrf.mxu0
    %v748 = vadd.f32 0.0, %v747
    %v749 = vpop.f32.mrf.mxu0
    %v750 = vadd.f32 0.0, %v749
    %751 = vdwg.mxu0
    %752 = vmatpush.bf16.msra.mxu0 0
    %753 = vmatpush.bf16.msra.mxu0 0
    %754 = vmatpush.bf16.msra.mxu0 0
    %755 = vmatpush.bf16.msra.mxu0 0
    %756 = vmatpush.bf16.msra.mxu0 0
    %757 = vmatpush.bf16.msra.mxu0 0
    %758 = vmatpush.bf16.msra.mxu0 %v211
    %759 = vmatpush.bf16.msra.mxu0 %v199
    %760 = vmatmul.bf16.gmra.mxu0 %v239
    %v761 = vpop.f32.mrf.mxu0
    %v762 = vadd.f32 0.0, %v761
    %v763 = vpop.f32.mrf.mxu0
    %v764 = vadd.f32 0.0, %v763
    %765 = vmatmul.bf16.gmra.mxu0 %v242
    %v766 = vpop.f32.mrf.mxu0
    %v767 = vadd.f32 0.0, %v766
    %v768 = vpop.f32.mrf.mxu0
    %v769 = vadd.f32 0.0, %v768
    %770 = vmatmul.bf16.gmra.mxu0 %v245
    %v771 = vpop.f32.mrf.mxu0
    %v772 = vadd.f32 0.0, %v771
    %v773 = vpop.f32.mrf.mxu0
    %v774 = vadd.f32 0.0, %v773
    %775 = vmatmul.bf16.gmra.mxu0 %v248
    %v776 = vpop.f32.mrf.mxu0
    %v777 = vadd.f32 0.0, %v776
    %v778 = vpop.f32.mrf.mxu0
    %v779 = vadd.f32 0.0, %v778
    %780 = vmatmul.bf16.gmra.mxu0 %v251
    %v781 = vpop.f32.mrf.mxu0
    %v782 = vadd.f32 0.0, %v781
    %v783 = vpop.f32.mrf.mxu0
    %v784 = vadd.f32 0.0, %v783
    %785 = vmatmul.bf16.gmra.mxu0 %v254
    %v786 = vpop.f32.mrf.mxu0
    %v787 = vadd.f32 0.0, %v786
    %v788 = vpop.f32.mrf.mxu0
    %v789 = vadd.f32 0.0, %v788
    %790 = vmatmul.bf16.gmra.mxu0 %v257
    %v791 = vpop.f32.mrf.mxu0
    %v792 = vadd.f32 0.0, %v791
    %v793 = vpop.f32.mrf.mxu0
    %v794 = vadd.f32 0.0, %v793
    %795 = vmatmul.bf16.gmra.mxu0 %v260
    %v796 = vpop.f32.mrf.mxu0
    %v797 = vadd.f32 0.0, %v796
    %v798 = vpop.f32.mrf.mxu0
    %v799 = vadd.f32 0.0, %v798
    %800 = vdwg.mxu0
    %801 = vmatpush.bf16.msra.mxu0 0
    %802 = vmatpush.bf16.msra.mxu0 0
    %803 = vmatpush.bf16.msra.mxu0 0
    %804 = vmatpush.bf16.msra.mxu0 0
    %805 = vmatpush.bf16.msra.mxu0 0
    %806 = vmatpush.bf16.msra.mxu0 0
    %807 = vmatpush.bf16.msra.mxu0 %v212
    %808 = vmatpush.bf16.msra.mxu0 %v200
    %809 = vmatmul.bf16.gmra.mxu0 %v239
    %v810 = vpop.f32.mrf.mxu0
    %v811 = vadd.f32 0.0, %v810
    %v812 = vpop.f32.mrf.mxu0
    %v813 = vadd.f32 0.0, %v812
    %814 = vmatmul.bf16.gmra.mxu0 %v242
    %v815 = vpop.f32.mrf.mxu0
    %v816 = vadd.f32 0.0, %v815
    %v817 = vpop.f32.mrf.mxu0
    %v818 = vadd.f32 0.0, %v817
    %819 = vmatmul.bf16.gmra.mxu0 %v245
    %v820 = vpop.f32.mrf.mxu0
    %v821 = vadd.f32 0.0, %v820
    %v822 = vpop.f32.mrf.mxu0
    %v823 = vadd.f32 0.0, %v822
    %824 = vmatmul.bf16.gmra.mxu0 %v248
    %v825 = vpop.f32.mrf.mxu0
    %v826 = vadd.f32 0.0, %v825
    %v827 = vpop.f32.mrf.mxu0
    %v828 = vadd.f32 0.0, %v827
    %829 = vmatmul.bf16.gmra.mxu0 %v251
    %v830 = vpop.f32.mrf.mxu0
    %v831 = vadd.f32 0.0, %v830
    %v832 = vpop.f32.mrf.mxu0
    %v833 = vadd.f32 0.0, %v832
    %834 = vmatmul.bf16.gmra.mxu0 %v254
    %v835 = vpop.f32.mrf.mxu0
    %v836 = vadd.f32 0.0, %v835
    %v837 = vpop.f32.mrf.mxu0
    %v838 = vadd.f32 0.0, %v837
    %839 = vmatmul.bf16.gmra.mxu0 %v257
    %v840 = vpop.f32.mrf.mxu0
    %v841 = vadd.f32 0.0, %v840
    %v842 = vpop.f32.mrf.mxu0
    %v843 = vadd.f32 0.0, %v842
    %844 = vmatmul.bf16.gmra.mxu0 %v260
    %v845 = vpop.f32.mrf.mxu0
    %v846 = vadd.f32 0.0, %v845
    %v847 = vpop.f32.mrf.mxu0
    %v848 = vadd.f32 0.0, %v847
    %849 = vdwg.mxu0
    %v850 = vlaneseq
    %v851 = vshrl.u32 %v850, 7
    %v852 = vadd.s32 %v851, 8
    %v853 = vrot.slane %v321, 1
    %v854 = vrot.slane %v323, 1
    %v855 = vrot.slane %v326, 1
    %v856 = vrot.slane %v328, 1
    %v857 = vrot.slane %v331, 1
    %v858 = vrot.slane %v333, 1
    %v859 = vrot.slane %v336, 1
    %v860 = vrot.slane %v338, 1
    %v861 = vrot.slane %v341, 1
    %v862 = vrot.slane %v343, 1
    %v863 = vrot.slane %v346, 1
    %v864 = vrot.slane %v348, 1
    %v865 = vrot.slane %v351, 1
    %v866 = vrot.slane %v353, 1
    %v867 = vrot.slane %v356, 1
    %v868 = vrot.slane %v358, 1
    %vm869 = vcmp.lt.s32.totalorder %v851, 7
    %v870 = vsel %vm869, %v867, %v868
    %v871 = vsel %vm869, %v866, %v867
    %v872 = vsel %vm869, %v865, %v866
    %v873 = vsel %vm869, %v864, %v865
    %v874 = vsel %vm869, %v863, %v864
    %v875 = vsel %vm869, %v862, %v863
    %v876 = vsel %vm869, %v861, %v862
    %v877 = vsel %vm869, %v860, %v861
    %v878 = vsel %vm869, %v859, %v860
    %v879 = vsel %vm869, %v858, %v859
    %v880 = vsel %vm869, %v857, %v858
    %v881 = vsel %vm869, %v856, %v857
    %v882 = vsel %vm869, %v855, %v856
    %v883 = vsel %vm869, %v854, %v855
    %v884 = vsel %vm869, %v853, %v854
    %v885 = vsel %vm869, %v868, %v853
    %v886 = vadd.f32 %v272, %v884
    %v887 = vadd.f32 %v274, %v883
    %v888 = vadd.f32 %v277, %v882
    %v889 = vadd.f32 %v279, %v881
    %v890 = vadd.f32 %v282, %v880
    %v891 = vadd.f32 %v284, %v879
    %v892 = vadd.f32 %v287, %v878
    %v893 = vadd.f32 %v289, %v877
    %v894 = vadd.f32 %v292, %v876
    %v895 = vadd.f32 %v294, %v875
    %v896 = vadd.f32 %v297, %v874
    %v897 = vadd.f32 %v299, %v873
    %v898 = vadd.f32 %v302, %v872
    %v899 = vadd.f32 %v304, %v871
    %v900 = vadd.f32 %v307, %v870
    %v901 = vadd.f32 %v309, %v885
    %v902 = vrot.slane %v370, 2
    %v903 = vrot.slane %v372, 2
    %v904 = vrot.slane %v375, 2
    %v905 = vrot.slane %v377, 2
    %v906 = vrot.slane %v380, 2
    %v907 = vrot.slane %v382, 2
    %v908 = vrot.slane %v385, 2
    %v909 = vrot.slane %v387, 2
    %v910 = vrot.slane %v390, 2
    %v911 = vrot.slane %v392, 2
    %v912 = vrot.slane %v395, 2
    %v913 = vrot.slane %v397, 2
    %v914 = vrot.slane %v400, 2
    %v915 = vrot.slane %v402, 2
    %v916 = vrot.slane %v405, 2
    %v917 = vrot.slane %v407, 2
    %vm918 = vcmp.lt.s32.totalorder %v851, 6
    %v919 = vsel %vm918, %v916, %v917
    %v920 = vsel %vm918, %v915, %v916
    %v921 = vsel %vm918, %v914, %v915
    %v922 = vsel %vm918, %v913, %v914
    %v923 = vsel %vm918, %v912, %v913
    %v924 = vsel %vm918, %v911, %v912
    %v925 = vsel %vm918, %v910, %v911
    %v926 = vsel %vm918, %v909, %v910
    %v927 = vsel %vm918, %v908, %v909
    %v928 = vsel %vm918, %v907, %v908
    %v929 = vsel %vm918, %v906, %v907
    %v930 = vsel %vm918, %v905, %v906
    %v931 = vsel %vm918, %v904, %v905
    %v932 = vsel %vm918, %v903, %v904
    %v933 = vsel %vm918, %v902, %v903
    %v934 = vsel %vm918, %v917, %v902
    %v935 = vadd.f32 %v886, %v933
    %v936 = vadd.f32 %v887, %v932
    %v937 = vadd.f32 %v888, %v931
    %v938 = vadd.f32 %v889, %v930
    %v939 = vadd.f32 %v890, %v929
    %v940 = vadd.f32 %v891, %v928
    %v941 = vadd.f32 %v892, %v927
    %v942 = vadd.f32 %v893, %v926
    %v943 = vadd.f32 %v894, %v925
    %v944 = vadd.f32 %v895, %v924
    %v945 = vadd.f32 %v896, %v923
    %v946 = vadd.f32 %v897, %v922
    %v947 = vadd.f32 %v898, %v921
    %v948 = vadd.f32 %v899, %v920
    %v949 = vadd.f32 %v900, %v919
    %v950 = vadd.f32 %v901, %v934
    %vm951 = vcmp.lt.s32.totalorder %v851, 14
    %vm952 = vcmp.lt.s32.totalorder %v852, 14
    %v953 = vsel %vm951, 1, 0
    %v954 = vsel %vm952, 1, 0
    %vm955 = vcmp.eq.s32.totalorder %v953, 1
    %vm956 = vcmp.eq.s32.totalorder %v954, 1
    %v957 = vsel %vm955, %v935, -inf
    %v958 = vsel %vm956, %v936, -inf
    %v959 = vsel %vm955, %v937, -inf
    %v960 = vsel %vm956, %v938, -inf
    %v961 = vsel %vm955, %v939, -inf
    %v962 = vsel %vm956, %v940, -inf
    %v963 = vsel %vm955, %v941, -inf
    %v964 = vsel %vm956, %v942, -inf
    %v965 = vsel %vm955, %v943, -inf
    %v966 = vsel %vm956, %v944, -inf
    %v967 = vsel %vm955, %v945, -inf
    %v968 = vsel %vm956, %v946, -inf
    %v969 = vsel %vm955, %v947, -inf
    %v970 = vsel %vm956, %v948, -inf
    %v971 = vsel %vm955, %v949, -inf
    %v972 = vsel %vm956, %v950, -inf
    %v973 = vmax.f32 %v957, %v958
    %v974 = vrot.slane %v973, 4
    %v975 = vmax.f32 %v973, %v974
    %v976 = vrot.slane %v975, 2
    %v977 = vmax.f32 %v975, %v976
    %v978 = vrot.slane %v977, 1
    %v979 = vmax.f32 %v977, %v978
    %v980 = vmax.f32 %v959, %v960
    %v981 = vrot.slane %v980, 4
    %v982 = vmax.f32 %v980, %v981
    %v983 = vrot.slane %v982, 2
    %v984 = vmax.f32 %v982, %v983
    %v985 = vrot.slane %v984, 1
    %v986 = vmax.f32 %v984, %v985
    %v987 = vmax.f32 %v961, %v962
    %v988 = vrot.slane %v987, 4
    %v989 = vmax.f32 %v987, %v988
    %v990 = vrot.slane %v989, 2
    %v991 = vmax.f32 %v989, %v990
    %v992 = vrot.slane %v991, 1
    %v993 = vmax.f32 %v991, %v992
    %v994 = vmax.f32 %v963, %v964
    %v995 = vrot.slane %v994, 4
    %v996 = vmax.f32 %v994, %v995
    %v997 = vrot.slane %v996, 2
    %v998 = vmax.f32 %v996, %v997
    %v999 = vrot.slane %v998, 1
    %v1000 = vmax.f32 %v998, %v999
    %v1001 = vmax.f32 %v965, %v966
    %v1002 = vrot.slane %v1001, 4
    %v1003 = vmax.f32 %v1001, %v1002
    %v1004 = vrot.slane %v1003, 2
    %v1005 = vmax.f32 %v1003, %v1004
    %v1006 = vrot.slane %v1005, 1
    %v1007 = vmax.f32 %v1005, %v1006
    %v1008 = vmax.f32 %v967, %v968
    %v1009 = vrot.slane %v1008, 4
    %v1010 = vmax.f32 %v1008, %v1009
    %v1011 = vrot.slane %v1010, 2
    %v1012 = vmax.f32 %v1010, %v1011
    %v1013 = vrot.slane %v1012, 1
    %v1014 = vmax.f32 %v1012, %v1013
    %v1015 = vmax.f32 %v969, %v970
    %v1016 = vrot.slane %v1015, 4
    %v1017 = vmax.f32 %v1015, %v1016
    %v1018 = vrot.slane %v1017, 2
    %v1019 = vmax.f32 %v1017, %v1018
    %v1020 = vrot.slane %v1019, 1
    %v1021 = vmax.f32 %v1019, %v1020
    %v1022 = vmax.f32 %v971, %v972
    %v1023 = vrot.slane %v1022, 4
    %v1024 = vmax.f32 %v1022, %v1023
    %v1025 = vrot.slane %v1024, 2
    %v1026 = vmax.f32 %v1024, %v1025
    %v1027 = vrot.slane %v1026, 1
    %v1028 = vmax.f32 %v1026, %v1027
    %v1029 = vrot.slane %v468, 1
    %v1030 = vrot.slane %v470, 1
    %v1031 = vrot.slane %v473, 1
    %v1032 = vrot.slane %v475, 1
    %v1033 = vrot.slane %v478, 1
    %v1034 = vrot.slane %v480, 1
    %v1035 = vrot.slane %v483, 1
    %v1036 = vrot.slane %v485, 1
    %v1037 = vrot.slane %v488, 1
    %v1038 = vrot.slane %v490, 1
    %v1039 = vrot.slane %v493, 1
    %v1040 = vrot.slane %v495, 1
    %v1041 = vrot.slane %v498, 1
    %v1042 = vrot.slane %v500, 1
    %v1043 = vrot.slane %v503, 1
    %v1044 = vrot.slane %v505, 1
    %v1045 = vsel %vm869, %v1043, %v1044
    %v1046 = vsel %vm869, %v1042, %v1043
    %v1047 = vsel %vm869, %v1041, %v1042
    %v1048 = vsel %vm869, %v1040, %v1041
    %v1049 = vsel %vm869, %v1039, %v1040
    %v1050 = vsel %vm869, %v1038, %v1039
    %v1051 = vsel %vm869, %v1037, %v1038
    %v1052 = vsel %vm869, %v1036, %v1037
    %v1053 = vsel %vm869, %v1035, %v1036
    %v1054 = vsel %vm869, %v1034, %v1035
    %v1055 = vsel %vm869, %v1033, %v1034
    %v1056 = vsel %vm869, %v1032, %v1033
    %v1057 = vsel %vm869, %v1031, %v1032
    %v1058 = vsel %vm869, %v1030, %v1031
    %v1059 = vsel %vm869, %v1029, %v1030
    %v1060 = vsel %vm869, %v1044, %v1029
    %v1061 = vadd.f32 %v419, %v1059
    %v1062 = vadd.f32 %v421, %v1058
    %v1063 = vadd.f32 %v424, %v1057
    %v1064 = vadd.f32 %v426, %v1056
    %v1065 = vadd.f32 %v429, %v1055
    %v1066 = vadd.f32 %v431, %v1054
    %v1067 = vadd.f32 %v434, %v1053
    %v1068 = vadd.f32 %v436, %v1052
    %v1069 = vadd.f32 %v439, %v1051
    %v1070 = vadd.f32 %v441, %v1050
    %v1071 = vadd.f32 %v444, %v1049
    %v1072 = vadd.f32 %v446, %v1048
    %v1073 = vadd.f32 %v449, %v1047
    %v1074 = vadd.f32 %v451, %v1046
    %v1075 = vadd.f32 %v454, %v1045
    %v1076 = vadd.f32 %v456, %v1060
    %v1077 = vrot.slane %v517, 2
    %v1078 = vrot.slane %v519, 2
    %v1079 = vrot.slane %v522, 2
    %v1080 = vrot.slane %v524, 2
    %v1081 = vrot.slane %v527, 2
    %v1082 = vrot.slane %v529, 2
    %v1083 = vrot.slane %v532, 2
    %v1084 = vrot.slane %v534, 2
    %v1085 = vrot.slane %v537, 2
    %v1086 = vrot.slane %v539, 2
    %v1087 = vrot.slane %v542, 2
    %v1088 = vrot.slane %v544, 2
    %v1089 = vrot.slane %v547, 2
    %v1090 = vrot.slane %v549, 2
    %v1091 = vrot.slane %v552, 2
    %v1092 = vrot.slane %v554, 2
    %v1093 = vsel %vm918, %v1091, %v1092
    %v1094 = vsel %vm918, %v1090, %v1091
    %v1095 = vsel %vm918, %v1089, %v1090
    %v1096 = vsel %vm918, %v1088, %v1089
    %v1097 = vsel %vm918, %v1087, %v1088
    %v1098 = vsel %vm918, %v1086, %v1087
    %v1099 = vsel %vm918, %v1085, %v1086
    %v1100 = vsel %vm918, %v1084, %v1085
    %v1101 = vsel %vm918, %v1083, %v1084
    %v1102 = vsel %vm918, %v1082, %v1083
    %v1103 = vsel %vm918, %v1081, %v1082
    %v1104 = vsel %vm918, %v1080, %v1081
    %v1105 = vsel %vm918, %v1079, %v1080
    %v1106 = vsel %vm918, %v1078, %v1079
    %v1107 = vsel %vm918, %v1077, %v1078
    %v1108 = vsel %vm918, %v1092, %v1077
    %v1109 = vadd.f32 %v1061, %v1107
    %v1110 = vadd.f32 %v1062, %v1106
    %v1111 = vadd.f32 %v1063, %v1105
    %v1112 = vadd.f32 %v1064, %v1104
    %v1113 = vadd.f32 %v1065, %v1103
    %v1114 = vadd.f32 %v1066, %v1102
    %v1115 = vadd.f32 %v1067, %v1101
    %v1116 = vadd.f32 %v1068, %v1100
    %v1117 = vadd.f32 %v1069, %v1099
    %v1118 = vadd.f32 %v1070, %v1098
    %v1119 = vadd.f32 %v1071, %v1097
    %v1120 = vadd.f32 %v1072, %v1096
    %v1121 = vadd.f32 %v1073, %v1095
    %v1122 = vadd.f32 %v1074, %v1094
    %v1123 = vadd.f32 %v1075, %v1093
    %v1124 = vadd.f32 %v1076, %v1108
    %v1125 = vrot.slane %v566, 3
    %v1126 = vrot.slane %v568, 3
    %v1127 = vrot.slane %v571, 3
    %v1128 = vrot.slane %v573, 3
    %v1129 = vrot.slane %v576, 3
    %v1130 = vrot.slane %v578, 3
    %v1131 = vrot.slane %v581, 3
    %v1132 = vrot.slane %v583, 3
    %v1133 = vrot.slane %v586, 3
    %v1134 = vrot.slane %v588, 3
    %v1135 = vrot.slane %v591, 3
    %v1136 = vrot.slane %v593, 3
    %v1137 = vrot.slane %v596, 3
    %v1138 = vrot.slane %v598, 3
    %v1139 = vrot.slane %v601, 3
    %v1140 = vrot.slane %v603, 3
    %vm1141 = vcmp.lt.s32.totalorder %v851, 5
    %v1142 = vsel %vm1141, %v1139, %v1140
    %v1143 = vsel %vm1141, %v1138, %v1139
    %v1144 = vsel %vm1141, %v1137, %v1138
    %v1145 = vsel %vm1141, %v1136, %v1137
    %v1146 = vsel %vm1141, %v1135, %v1136
    %v1147 = vsel %vm1141, %v1134, %v1135
    %v1148 = vsel %vm1141, %v1133, %v1134
    %v1149 = vsel %vm1141, %v1132, %v1133
    %v1150 = vsel %vm1141, %v1131, %v1132
    %v1151 = vsel %vm1141, %v1130, %v1131
    %v1152 = vsel %vm1141, %v1129, %v1130
    %v1153 = vsel %vm1141, %v1128, %v1129
    %v1154 = vsel %vm1141, %v1127, %v1128
    %v1155 = vsel %vm1141, %v1126, %v1127
    %v1156 = vsel %vm1141, %v1125, %v1126
    %v1157 = vsel %vm1141, %v1140, %v1125
    %v1158 = vadd.f32 %v1109, %v1156
    %v1159 = vadd.f32 %v1110, %v1155
    %v1160 = vadd.f32 %v1111, %v1154
    %v1161 = vadd.f32 %v1112, %v1153
    %v1162 = vadd.f32 %v1113, %v1152
    %v1163 = vadd.f32 %v1114, %v1151
    %v1164 = vadd.f32 %v1115, %v1150
    %v1165 = vadd.f32 %v1116, %v1149
    %v1166 = vadd.f32 %v1117, %v1148
    %v1167 = vadd.f32 %v1118, %v1147
    %v1168 = vadd.f32 %v1119, %v1146
    %v1169 = vadd.f32 %v1120, %v1145
    %v1170 = vadd.f32 %v1121, %v1144
    %v1171 = vadd.f32 %v1122, %v1143
    %v1172 = vadd.f32 %v1123, %v1142
    %v1173 = vadd.f32 %v1124, %v1157
    %vm1174 = vcmp.lt.s32.totalorder %v851, 13
    %vm1175 = vcmp.lt.s32.totalorder %v852, 13
    %v1176 = vsel %vm1174, 1, 0
    %v1177 = vsel %vm1175, 1, 0
    %vm1178 = vcmp.eq.s32.totalorder %v1176, 1
    %vm1179 = vcmp.eq.s32.totalorder %v1177, 1
    %v1180 = vsel %vm1178, %v1158, -inf
    %v1181 = vsel %vm1179, %v1159, -inf
    %v1182 = vsel %vm1178, %v1160, -inf
    %v1183 = vsel %vm1179, %v1161, -inf
    %v1184 = vsel %vm1178, %v1162, -inf
    %v1185 = vsel %vm1179, %v1163, -inf
    %v1186 = vsel %vm1178, %v1164, -inf
    %v1187 = vsel %vm1179, %v1165, -inf
    %v1188 = vsel %vm1178, %v1166, -inf
    %v1189 = vsel %vm1179, %v1167, -inf
    %v1190 = vsel %vm1178, %v1168, -inf
    %v1191 = vsel %vm1179, %v1169, -inf
    %v1192 = vsel %vm1178, %v1170, -inf
    %v1193 = vsel %vm1179, %v1171, -inf
    %v1194 = vsel %vm1178, %v1172, -inf
    %v1195 = vsel %vm1179, %v1173, -inf
    %v1196 = vmax.f32 %v1180, %v1181
    %v1197 = vrot.slane %v1196, 4
    %v1198 = vmax.f32 %v1196, %v1197
    %v1199 = vrot.slane %v1198, 2
    %v1200 = vmax.f32 %v1198, %v1199
    %v1201 = vrot.slane %v1200, 1
    %v1202 = vmax.f32 %v1200, %v1201
    %v1203 = vmax.f32 %v1182, %v1183
    %v1204 = vrot.slane %v1203, 4
    %v1205 = vmax.f32 %v1203, %v1204
    %v1206 = vrot.slane %v1205, 2
    %v1207 = vmax.f32 %v1205, %v1206
    %v1208 = vrot.slane %v1207, 1
    %v1209 = vmax.f32 %v1207, %v1208
    %v1210 = vmax.f32 %v1184, %v1185
    %v1211 = vrot.slane %v1210, 4
    %v1212 = vmax.f32 %v1210, %v1211
    %v1213 = vrot.slane %v1212, 2
    %v1214 = vmax.f32 %v1212, %v1213
    %v1215 = vrot.slane %v1214, 1
    %v1216 = vmax.f32 %v1214, %v1215
    %v1217 = vmax.f32 %v1186, %v1187
    %v1218 = vrot.slane %v1217, 4
    %v1219 = vmax.f32 %v1217, %v1218
    %v1220 = vrot.slane %v1219, 2
    %v1221 = vmax.f32 %v1219, %v1220
    %v1222 = vrot.slane %v1221, 1
    %v1223 = vmax.f32 %v1221, %v1222
    %v1224 = vmax.f32 %v1188, %v1189
    %v1225 = vrot.slane %v1224, 4
    %v1226 = vmax.f32 %v1224, %v1225
    %v1227 = vrot.slane %v1226, 2
    %v1228 = vmax.f32 %v1226, %v1227
    %v1229 = vrot.slane %v1228, 1
    %v1230 = vmax.f32 %v1228, %v1229
    %v1231 = vmax.f32 %v1190, %v1191
    %v1232 = vrot.slane %v1231, 4
    %v1233 = vmax.f32 %v1231, %v1232
    %v1234 = vrot.slane %v1233, 2
    %v1235 = vmax.f32 %v1233, %v1234
    %v1236 = vrot.slane %v1235, 1
    %v1237 = vmax.f32 %v1235, %v1236
    %v1238 = vmax.f32 %v1192, %v1193
    %v1239 = vrot.slane %v1238, 4
    %v1240 = vmax.f32 %v1238, %v1239
    %v1241 = vrot.slane %v1240, 2
    %v1242 = vmax.f32 %v1240, %v1241
    %v1243 = vrot.slane %v1242, 1
    %v1244 = vmax.f32 %v1242, %v1243
    %v1245 = vmax.f32 %v1194, %v1195
    %v1246 = vrot.slane %v1245, 4
    %v1247 = vmax.f32 %v1245, %v1246
    %v1248 = vrot.slane %v1247, 2
    %v1249 = vmax.f32 %v1247, %v1248
    %v1250 = vrot.slane %v1249, 1
    %v1251 = vmax.f32 %v1249, %v1250
    %v1252 = vrot.slane %v664, 1
    %v1253 = vrot.slane %v666, 1
    %v1254 = vrot.slane %v669, 1
    %v1255 = vrot.slane %v671, 1
    %v1256 = vrot.slane %v674, 1
    %v1257 = vrot.slane %v676, 1
    %v1258 = vrot.slane %v679, 1
    %v1259 = vrot.slane %v681, 1
    %v1260 = vrot.slane %v684, 1
    %v1261 = vrot.slane %v686, 1
    %v1262 = vrot.slane %v689, 1
    %v1263 = vrot.slane %v691, 1
    %v1264 = vrot.slane %v694, 1
    %v1265 = vrot.slane %v696, 1
    %v1266 = vrot.slane %v699, 1
    %v1267 = vrot.slane %v701, 1
    %v1268 = vsel %vm869, %v1266, %v1267
    %v1269 = vsel %vm869, %v1265, %v1266
    %v1270 = vsel %vm869, %v1264, %v1265
    %v1271 = vsel %vm869, %v1263, %v1264
    %v1272 = vsel %vm869, %v1262, %v1263
    %v1273 = vsel %vm869, %v1261, %v1262
    %v1274 = vsel %vm869, %v1260, %v1261
    %v1275 = vsel %vm869, %v1259, %v1260
    %v1276 = vsel %vm869, %v1258, %v1259
    %v1277 = vsel %vm869, %v1257, %v1258
    %v1278 = vsel %vm869, %v1256, %v1257
    %v1279 = vsel %vm869, %v1255, %v1256
    %v1280 = vsel %vm869, %v1254, %v1255
    %v1281 = vsel %vm869, %v1253, %v1254
    %v1282 = vsel %vm869, %v1252, %v1253
    %v1283 = vsel %vm869, %v1267, %v1252
    %v1284 = vadd.f32 %v615, %v1282
    %v1285 = vadd.f32 %v617, %v1281
    %v1286 = vadd.f32 %v620, %v1280
    %v1287 = vadd.f32 %v622, %v1279
    %v1288 = vadd.f32 %v625, %v1278
    %v1289 = vadd.f32 %v627, %v1277
    %v1290 = vadd.f32 %v630, %v1276
    %v1291 = vadd.f32 %v632, %v1275
    %v1292 = vadd.f32 %v635, %v1274
    %v1293 = vadd.f32 %v637, %v1273
    %v1294 = vadd.f32 %v640, %v1272
    %v1295 = vadd.f32 %v642, %v1271
    %v1296 = vadd.f32 %v645, %v1270
    %v1297 = vadd.f32 %v647, %v1269
    %v1298 = vadd.f32 %v650, %v1268
    %v1299 = vadd.f32 %v652, %v1283
    %v1300 = vrot.slane %v713, 2
    %v1301 = vrot.slane %v715, 2
    %v1302 = vrot.slane %v718, 2
    %v1303 = vrot.slane %v720, 2
    %v1304 = vrot.slane %v723, 2
    %v1305 = vrot.slane %v725, 2
    %v1306 = vrot.slane %v728, 2
    %v1307 = vrot.slane %v730, 2
    %v1308 = vrot.slane %v733, 2
    %v1309 = vrot.slane %v735, 2
    %v1310 = vrot.slane %v738, 2
    %v1311 = vrot.slane %v740, 2
    %v1312 = vrot.slane %v743, 2
    %v1313 = vrot.slane %v745, 2
    %v1314 = vrot.slane %v748, 2
    %v1315 = vrot.slane %v750, 2
    %v1316 = vsel %vm918, %v1314, %v1315
    %v1317 = vsel %vm918, %v1313, %v1314
    %v1318 = vsel %vm918, %v1312, %v1313
    %v1319 = vsel %vm918, %v1311, %v1312
    %v1320 = vsel %vm918, %v1310, %v1311
    %v1321 = vsel %vm918, %v1309, %v1310
    %v1322 = vsel %vm918, %v1308, %v1309
    %v1323 = vsel %vm918, %v1307, %v1308
    %v1324 = vsel %vm918, %v1306, %v1307
    %v1325 = vsel %vm918, %v1305, %v1306
    %v1326 = vsel %vm918, %v1304, %v1305
    %v1327 = vsel %vm918, %v1303, %v1304
    %v1328 = vsel %vm918, %v1302, %v1303
    %v1329 = vsel %vm918, %v1301, %v1302
    %v1330 = vsel %vm918, %v1300, %v1301
    %v1331 = vsel %vm918, %v1315, %v1300
    %v1332 = vadd.f32 %v1284, %v1330
    %v1333 = vadd.f32 %v1285, %v1329
    %v1334 = vadd.f32 %v1286, %v1328
    %v1335 = vadd.f32 %v1287, %v1327
    %v1336 = vadd.f32 %v1288, %v1326
    %v1337 = vadd.f32 %v1289, %v1325
    %v1338 = vadd.f32 %v1290, %v1324
    %v1339 = vadd.f32 %v1291, %v1323
    %v1340 = vadd.f32 %v1292, %v1322
    %v1341 = vadd.f32 %v1293, %v1321
    %v1342 = vadd.f32 %v1294, %v1320
    %v1343 = vadd.f32 %v1295, %v1319
    %v1344 = vadd.f32 %v1296, %v1318
    %v1345 = vadd.f32 %v1297, %v1317
    %v1346 = vadd.f32 %v1298, %v1316
    %v1347 = vadd.f32 %v1299, %v1331
    %v1348 = vrot.slane %v762, 3
    %v1349 = vrot.slane %v764, 3
    %v1350 = vrot.slane %v767, 3
    %v1351 = vrot.slane %v769, 3
    %v1352 = vrot.slane %v772, 3
    %v1353 = vrot.slane %v774, 3
    %v1354 = vrot.slane %v777, 3
    %v1355 = vrot.slane %v779, 3
    %v1356 = vrot.slane %v782, 3
    %v1357 = vrot.slane %v784, 3
    %v1358 = vrot.slane %v787, 3
    %v1359 = vrot.slane %v789, 3
    %v1360 = vrot.slane %v792, 3
    %v1361 = vrot.slane %v794, 3
    %v1362 = vrot.slane %v797, 3
    %v1363 = vrot.slane %v799, 3
    %v1364 = vsel %vm1141, %v1362, %v1363
    %v1365 = vsel %vm1141, %v1361, %v1362
    %v1366 = vsel %vm1141, %v1360, %v1361
    %v1367 = vsel %vm1141, %v1359, %v1360
    %v1368 = vsel %vm1141, %v1358, %v1359
    %v1369 = vsel %vm1141, %v1357, %v1358
    %v1370 = vsel %vm1141, %v1356, %v1357
    %v1371 = vsel %vm1141, %v1355, %v1356
    %v1372 = vsel %vm1141, %v1354, %v1355
    %v1373 = vsel %vm1141, %v1353, %v1354
    %v1374 = vsel %vm1141, %v1352, %v1353
    %v1375 = vsel %vm1141, %v1351, %v1352
    %v1376 = vsel %vm1141, %v1350, %v1351
    %v1377 = vsel %vm1141, %v1349, %v1350
    %v1378 = vsel %vm1141, %v1348, %v1349
    %v1379 = vsel %vm1141, %v1363, %v1348
    %v1380 = vadd.f32 %v1332, %v1378
    %v1381 = vadd.f32 %v1333, %v1377
    %v1382 = vadd.f32 %v1334, %v1376
    %v1383 = vadd.f32 %v1335, %v1375
    %v1384 = vadd.f32 %v1336, %v1374
    %v1385 = vadd.f32 %v1337, %v1373
    %v1386 = vadd.f32 %v1338, %v1372
    %v1387 = vadd.f32 %v1339, %v1371
    %v1388 = vadd.f32 %v1340, %v1370
    %v1389 = vadd.f32 %v1341, %v1369
    %v1390 = vadd.f32 %v1342, %v1368
    %v1391 = vadd.f32 %v1343, %v1367
    %v1392 = vadd.f32 %v1344, %v1366
    %v1393 = vadd.f32 %v1345, %v1365
    %v1394 = vadd.f32 %v1346, %v1364
    %v1395 = vadd.f32 %v1347, %v1379
    %v1396 = vrot.slane %v811, 4
    %v1397 = vrot.slane %v813, 4
    %v1398 = vrot.slane %v816, 4
    %v1399 = vrot.slane %v818, 4
    %v1400 = vrot.slane %v821, 4
    %v1401 = vrot.slane %v823, 4
    %v1402 = vrot.slane %v826, 4
    %v1403 = vrot.slane %v828, 4
    %v1404 = vrot.slane %v831, 4
    %v1405 = vrot.slane %v833, 4
    %v1406 = vrot.slane %v836, 4
    %v1407 = vrot.slane %v838, 4
    %v1408 = vrot.slane %v841, 4
    %v1409 = vrot.slane %v843, 4
    %v1410 = vrot.slane %v846, 4
    %v1411 = vrot.slane %v848, 4
    %vm1412 = vcmp.lt.s32.totalorder %v851, 4
    %v1413 = vsel %vm1412, %v1410, %v1411
    %v1414 = vsel %vm1412, %v1409, %v1410
    %v1415 = vsel %vm1412, %v1408, %v1409
    %v1416 = vsel %vm1412, %v1407, %v1408
    %v1417 = vsel %vm1412, %v1406, %v1407
    %v1418 = vsel %vm1412, %v1405, %v1406
    %v1419 = vsel %vm1412, %v1404, %v1405
    %v1420 = vsel %vm1412, %v1403, %v1404
    %v1421 = vsel %vm1412, %v1402, %v1403
    %v1422 = vsel %vm1412, %v1401, %v1402
    %v1423 = vsel %vm1412, %v1400, %v1401
    %v1424 = vsel %vm1412, %v1399, %v1400
    %v1425 = vsel %vm1412, %v1398, %v1399
    %v1426 = vsel %vm1412, %v1397, %v1398
    %v1427 = vsel %vm1412, %v1396, %v1397
    %v1428 = vsel %vm1412, %v1411, %v1396
    %v1429 = vadd.f32 %v1380, %v1427
    %v1430 = vadd.f32 %v1381, %v1426
    %v1431 = vadd.f32 %v1382, %v1425
    %v1432 = vadd.f32 %v1383, %v1424
    %v1433 = vadd.f32 %v1384, %v1423
    %v1434 = vadd.f32 %v1385, %v1422
    %v1435 = vadd.f32 %v1386, %v1421
    %v1436 = vadd.f32 %v1387, %v1420
    %v1437 = vadd.f32 %v1388, %v1419
    %v1438 = vadd.f32 %v1389, %v1418
    %v1439 = vadd.f32 %v1390, %v1417
    %v1440 = vadd.f32 %v1391, %v1416
    %v1441 = vadd.f32 %v1392, %v1415
    %v1442 = vadd.f32 %v1393, %v1414
    %v1443 = vadd.f32 %v1394, %v1413
    %v1444 = vadd.f32 %v1395, %v1428
    %vm1445 = vcmp.lt.s32.totalorder %v851, 12
    %vm1446 = vcmp.lt.s32.totalorder %v852, 12
    %v1447 = vsel %vm1445, 1, 0
    %v1448 = vsel %vm1446, 1, 0
    %vm1449 = vcmp.eq.s32.totalorder %v1447, 1
    %vm1450 = vcmp.eq.s32.totalorder %v1448, 1
    %v1451 = vsel %vm1449, %v1429, -inf
    %v1452 = vsel %vm1450, %v1430, -inf
    %v1453 = vsel %vm1449, %v1431, -inf
    %v1454 = vsel %vm1450, %v1432, -inf
    %v1455 = vsel %vm1449, %v1433, -inf
    %v1456 = vsel %vm1450, %v1434, -inf
    %v1457 = vsel %vm1449, %v1435, -inf
    %v1458 = vsel %vm1450, %v1436, -inf
    %v1459 = vsel %vm1449, %v1437, -inf
    %v1460 = vsel %vm1450, %v1438, -inf
    %v1461 = vsel %vm1449, %v1439, -inf
    %v1462 = vsel %vm1450, %v1440, -inf
    %v1463 = vsel %vm1449, %v1441, -inf
    %v1464 = vsel %vm1450, %v1442, -inf
    %v1465 = vsel %vm1449, %v1443, -inf
    %v1466 = vsel %vm1450, %v1444, -inf
    %v1467 = vmax.f32 %v1451, %v1452
    %v1468 = vrot.slane %v1467, 4
    %v1469 = vmax.f32 %v1467, %v1468
    %v1470 = vrot.slane %v1469, 2
    %v1471 = vmax.f32 %v1469, %v1470
    %v1472 = vrot.slane %v1471, 1
    %v1473 = vmax.f32 %v1471, %v1472
    %v1474 = vmax.f32 %v1453, %v1454
    %v1475 = vrot.slane %v1474, 4
    %v1476 = vmax.f32 %v1474, %v1475
    %v1477 = vrot.slane %v1476, 2
    %v1478 = vmax.f32 %v1476, %v1477
    %v1479 = vrot.slane %v1478, 1
    %v1480 = vmax.f32 %v1478, %v1479
    %v1481 = vmax.f32 %v1455, %v1456
    %v1482 = vrot.slane %v1481, 4
    %v1483 = vmax.f32 %v1481, %v1482
    %v1484 = vrot.slane %v1483, 2
    %v1485 = vmax.f32 %v1483, %v1484
    %v1486 = vrot.slane %v1485, 1
    %v1487 = vmax.f32 %v1485, %v1486
    %v1488 = vmax.f32 %v1457, %v1458
    %v1489 = vrot.slane %v1488, 4
    %v1490 = vmax.f32 %v1488, %v1489
    %v1491 = vrot.slane %v1490, 2
    %v1492 = vmax.f32 %v1490, %v1491
    %v1493 = vrot.slane %v1492, 1
    %v1494 = vmax.f32 %v1492, %v1493
    %v1495 = vmax.f32 %v1459, %v1460
    %v1496 = vrot.slane %v1495, 4
    %v1497 = vmax.f32 %v1495, %v1496
    %v1498 = vrot.slane %v1497, 2
    %v1499 = vmax.f32 %v1497, %v1498
    %v1500 = vrot.slane %v1499, 1
    %v1501 = vmax.f32 %v1499, %v1500
    %v1502 = vmax.f32 %v1461, %v1462
    %v1503 = vrot.slane %v1502, 4
    %v1504 = vmax.f32 %v1502, %v1503
    %v1505 = vrot.slane %v1504, 2
    %v1506 = vmax.f32 %v1504, %v1505
    %v1507 = vrot.slane %v1506, 1
    %v1508 = vmax.f32 %v1506, %v1507
    %v1509 = vmax.f32 %v1463, %v1464
    %v1510 = vrot.slane %v1509, 4
    %v1511 = vmax.f32 %v1509, %v1510
    %v1512 = vrot.slane %v1511, 2
    %v1513 = vmax.f32 %v1511, %v1512
    %v1514 = vrot.slane %v1513, 1
    %v1515 = vmax.f32 %v1513, %v1514
    %v1516 = vmax.f32 %v1465, %v1466
    %v1517 = vrot.slane %v1516, 4
    %v1518 = vmax.f32 %v1516, %v1517
    %v1519 = vrot.slane %v1518, 2
    %v1520 = vmax.f32 %v1518, %v1519
    %v1521 = vrot.slane %v1520, 1
    %v1522 = vmax.f32 %v1520, %v1521
    %vm1531 = vcmask 1041409
    %v1532 = vsel %vm1531, %v986, %v979
    %vm1533 = vcmask 1042434
    %v1534 = vsel %vm1533, %v993, %v1532
    %vm1535 = vcmask 1043459
    %v1536 = vsel %vm1535, %v1000, %v1534
    %vm1537 = vcmask 1044484
    %v1538 = vsel %vm1537, %v1007, %v1536
    %vm1539 = vcmask 1045509
    %v1540 = vsel %vm1539, %v1014, %v1538
    %vm1541 = vcmask 1046534
    %v1542 = vsel %vm1541, %v1021, %v1540
    %vm1543 = vcmask 1047559
    %v1544 = vsel %vm1543, %v1028, %v1542
    %v1554 = vsel %vm1531, %v1209, %v1202
    %v1555 = vsel %vm1533, %v1216, %v1554
    %v1556 = vsel %vm1535, %v1223, %v1555
    %v1557 = vsel %vm1537, %v1230, %v1556
    %v1558 = vsel %vm1539, %v1237, %v1557
    %v1559 = vsel %vm1541, %v1244, %v1558
    %v1560 = vsel %vm1543, %v1251, %v1559
    %v1570 = vsel %vm1531, %v1480, %v1473
    %v1571 = vsel %vm1533, %v1487, %v1570
    %v1572 = vsel %vm1535, %v1494, %v1571
    %v1573 = vsel %vm1537, %v1501, %v1572
    %v1574 = vsel %vm1539, %v1508, %v1573
    %v1575 = vsel %vm1541, %v1515, %v1574
    %v1576 = vsel %vm1543, %v1522, %v1575
    %v1578 = vld [vmem:[%s2] sm:$0x7]
    %v1580 = vperm.slane %v1578, 0
    %v1581 = vperm.slane %v1578, 1
    %v1582 = vperm.slane %v1578, 2
    %v1586 = vadd.f32 %v1544, %v1580
    %v1587 = vadd.f32 %v1560, %v1581
    %v1588 = vadd.f32 %v1576, %v1582
    %v1589 = vmax.f32 %v1586, 0.0
    %v1590 = vmax.f32 %v1587, 0.0
    %v1591 = vmax.f32 %v1588, 0.0
    %v1592 = vpack.c.bf16 %v1589, %v1589
    %v1593 = vpack.c.bf16 %v1590, %v1590
    %v1594 = vpack.c.bf16 %v1591, %v1591
    %v1595 = vld [vmem:[%s3] sm:$0xf]
    %v1596 = vld [vmem:[%s3 + $0x4] sm:$0xf]
    %v1597 = vld [vmem:[%s3 + $0x8] sm:$0xf]
    %v1598 = vld [vmem:[%s3 + $0xc] sm:$0xf]
    %v1599 = vld [vmem:[%s3 + $0x10] sm:$0xf]
    %v1600 = vld [vmem:[%s3 + $0x14] sm:$0xf]
    %v1601 = vld [vmem:[%s3 + $0x18] sm:$0xf]
    %v1602 = vld [vmem:[%s3 + $0x1c] sm:$0xf]
    %v1603 = vld [vmem:[%s3 + $0x20] sm:$0xf]
    %v1604 = vld [vmem:[%s3 + $0x24] sm:$0xf]
    %v1605 = vld [vmem:[%s3 + $0x28] sm:$0xf]
    %v1606 = vld [vmem:[%s3 + $0x2c] sm:$0xf]
    %v1607 = vld [vmem:[%s3 + $0x30] sm:$0xf]
    %v1608 = vld [vmem:[%s3 + $0x34] sm:$0xf]
    %v1609 = vld [vmem:[%s3 + $0x38] sm:$0xf]
    %v1610 = vld [vmem:[%s3 + $0x3c] sm:$0xf]
    %v1611 = vld [vmem:[%s3 + $0x40] sm:$0xf]
    %v1612 = vld [vmem:[%s3 + $0x44] sm:$0xf]
    %v1613 = vld [vmem:[%s3 + $0x48] sm:$0xf]
    %v1614 = vld [vmem:[%s3 + $0x4c] sm:$0xf]
    %v1615 = vld [vmem:[%s3 + $0x50] sm:$0xf]
    %v1616 = vld [vmem:[%s3 + $0x54] sm:$0xf]
    %v1617 = vld [vmem:[%s3 + $0x58] sm:$0xf]
    %v1618 = vld [vmem:[%s3 + $0x5c] sm:$0xf]
    %v1619 = vld [vmem:[%s3 + $0x60] sm:$0xf]
    %v1620 = vld [vmem:[%s3 + $0x64] sm:$0xf]
    %v1621 = vld [vmem:[%s3 + $0x68] sm:$0xf]
    %v1622 = vld [vmem:[%s3 + $0x6c] sm:$0xf]
    %v1623 = vld [vmem:[%s3 + $0x70] sm:$0xf]
    %v1624 = vld [vmem:[%s3 + $0x74] sm:$0xf]
    %v1625 = vld [vmem:[%s3 + $0x78] sm:$0xf]
    %v1626 = vld [vmem:[%s3 + $0x7c] sm:$0xf]
    %v1627 = vld [vmem:[%s3 + $0x80] sm:$0xf]
    %v1628 = vld [vmem:[%s3 + $0x84] sm:$0xf]
    %v1629 = vld [vmem:[%s3 + $0x88] sm:$0xf]
    %v1630 = vld [vmem:[%s3 + $0x8c] sm:$0xf]
    %v1631 = vld [vmem:[%s3 + $0x90] sm:$0xf]
    %v1632 = vld [vmem:[%s3 + $0x94] sm:$0xf]
    %v1633 = vld [vmem:[%s3 + $0x98] sm:$0xf]
    %v1634 = vld [vmem:[%s3 + $0x9c] sm:$0xf]
    %v1635 = vld [vmem:[%s3 + $0xa0] sm:$0xf]
    %v1636 = vld [vmem:[%s3 + $0xa4] sm:$0xf]
    %v1637 = vld [vmem:[%s3 + $0xa8] sm:$0xf]
    %v1638 = vld [vmem:[%s3 + $0xac] sm:$0xf]
    %v1639 = vld [vmem:[%s3 + $0xb0] sm:$0xf]
    %v1640 = vld [vmem:[%s3 + $0xb4] sm:$0xf]
    %v1641 = vld [vmem:[%s3 + $0xb8] sm:$0xf]
    %v1642 = vld [vmem:[%s3 + $0xbc] sm:$0xf]
    %v1643 = vld [vmem:[%s4] sm:$0x1]
    %v1645 = vperm.slane %v1643, 0
    %v1695 = vunpack.c.l.b16 %v1595
    %v1696 = vunpack.c.l.b16 %v1596
    %v1697 = vunpack.c.l.b16 %v1597
    %v1698 = vunpack.c.l.b16 %v1598
    %v1699 = vunpack.c.l.b16 %v1599
    %v1700 = vunpack.c.l.b16 %v1600
    %v1701 = vunpack.c.l.b16 %v1601
    %v1702 = vunpack.c.l.b16 %v1602
    %v1703 = vunpack.c.l.b16 %v1603
    %v1704 = vunpack.c.l.b16 %v1604
    %v1705 = vunpack.c.l.b16 %v1605
    %v1706 = vunpack.c.l.b16 %v1606
    %v1707 = vunpack.c.l.b16 %v1607
    %v1708 = vunpack.c.l.b16 %v1608
    %v1709 = vunpack.c.l.b16 %v1609
    %v1710 = vunpack.c.l.b16 %v1610
    %v1711 = vunpack.c.l.b16 %v1611
    %v1712 = vunpack.c.l.b16 %v1612
    %v1713 = vunpack.c.l.b16 %v1613
    %v1714 = vunpack.c.l.b16 %v1614
    %v1715 = vunpack.c.l.b16 %v1615
    %v1716 = vunpack.c.l.b16 %v1616
    %v1717 = vunpack.c.l.b16 %v1617
    %v1718 = vunpack.c.l.b16 %v1618
    %v1719 = vunpack.c.l.b16 %v1619
    %v1720 = vunpack.c.l.b16 %v1620
    %v1721 = vunpack.c.l.b16 %v1621
    %v1722 = vunpack.c.l.b16 %v1622
    %v1723 = vunpack.c.l.b16 %v1623
    %v1724 = vunpack.c.l.b16 %v1624
    %v1725 = vunpack.c.l.b16 %v1625
    %v1726 = vunpack.c.l.b16 %v1626
    %v1727 = vunpack.c.l.b16 %v1627
    %v1728 = vunpack.c.l.b16 %v1628
    %v1729 = vunpack.c.l.b16 %v1629
    %v1730 = vunpack.c.l.b16 %v1630
    %v1731 = vunpack.c.l.b16 %v1631
    %v1732 = vunpack.c.l.b16 %v1632
    %v1733 = vunpack.c.l.b16 %v1633
    %v1734 = vunpack.c.l.b16 %v1634
    %v1735 = vunpack.c.l.b16 %v1635
    %v1736 = vunpack.c.l.b16 %v1636
    %v1737 = vunpack.c.l.b16 %v1637
    %v1738 = vunpack.c.l.b16 %v1638
    %v1739 = vunpack.c.l.b16 %v1639
    %v1740 = vunpack.c.l.b16 %v1640
    %v1741 = vunpack.c.l.b16 %v1641
    %v1742 = vunpack.c.l.b16 %v1642
    %v1743 = vpack.c.b16 %v1696, %v1695
    %v1744 = vpack.c.b16 %v1698, %v1697
    %v1745 = vpack.c.b16 %v1700, %v1699
    %v1746 = vpack.c.b16 %v1702, %v1701
    %v1747 = vpack.c.b16 %v1704, %v1703
    %v1748 = vpack.c.b16 %v1706, %v1705
    %v1749 = vpack.c.b16 %v1708, %v1707
    %v1750 = vpack.c.b16 %v1710, %v1709
    %v1751 = vpack.c.b16 %v1712, %v1711
    %v1752 = vpack.c.b16 %v1714, %v1713
    %v1753 = vpack.c.b16 %v1716, %v1715
    %v1754 = vpack.c.b16 %v1718, %v1717
    %v1755 = vpack.c.b16 %v1720, %v1719
    %v1756 = vpack.c.b16 %v1722, %v1721
    %v1757 = vpack.c.b16 %v1724, %v1723
    %v1758 = vpack.c.b16 %v1726, %v1725
    %v1759 = vpack.c.b16 %v1728, %v1727
    %v1760 = vpack.c.b16 %v1730, %v1729
    %v1761 = vpack.c.b16 %v1732, %v1731
    %v1762 = vpack.c.b16 %v1734, %v1733
    %v1763 = vpack.c.b16 %v1736, %v1735
    %v1764 = vpack.c.b16 %v1738, %v1737
    %v1765 = vpack.c.b16 %v1740, %v1739
    %v1766 = vpack.c.b16 %v1742, %v1741
    %1791 = vmatpush.bf16.msra.mxu0 %v1750
    %1792 = vmatpush.bf16.msra.mxu0 %v1749
    %1793 = vmatpush.bf16.msra.mxu0 %v1748
    %1794 = vmatpush.bf16.msra.mxu0 %v1747
    %1795 = vmatpush.bf16.msra.mxu0 %v1746
    %1796 = vmatpush.bf16.msra.mxu0 %v1745
    %1797 = vmatpush.bf16.msra.mxu0 %v1744
    %1798 = vmatpush.bf16.msra.mxu0 %v1743
    %1799 = vmatmul.bf16.gmra.mxu0 %v1592
    %v1800 = vpop.f32.mrf.mxu0
    %v1801 = vadd.f32 %v1645, %v1800
    %v1802 = vpop.f32.mrf.mxu0
    %1803 = vdwg.mxu0
    %1804 = vmatpush.bf16.msra.mxu0 %v1758
    %1805 = vmatpush.bf16.msra.mxu0 %v1757
    %1806 = vmatpush.bf16.msra.mxu0 %v1756
    %1807 = vmatpush.bf16.msra.mxu0 %v1755
    %1808 = vmatpush.bf16.msra.mxu0 %v1754
    %1809 = vmatpush.bf16.msra.mxu0 %v1753
    %1810 = vmatpush.bf16.msra.mxu0 %v1752
    %1811 = vmatpush.bf16.msra.mxu0 %v1751
    %1812 = vmatmul.bf16.gmra.mxu0 %v1593
    %v1813 = vpop.f32.mrf.mxu0
    %v1814 = vadd.f32 %v1801, %v1813
    %v1815 = vpop.f32.mrf.mxu0
    %1816 = vdwg.mxu0
    %1817 = vmatpush.bf16.msra.mxu0 %v1766
    %1818 = vmatpush.bf16.msra.mxu0 %v1765
    %1819 = vmatpush.bf16.msra.mxu0 %v1764
    %1820 = vmatpush.bf16.msra.mxu0 %v1763
    %1821 = vmatpush.bf16.msra.mxu0 %v1762
    %1822 = vmatpush.bf16.msra.mxu0 %v1761
    %1823 = vmatpush.bf16.msra.mxu0 %v1760
    %1824 = vmatpush.bf16.msra.mxu0 %v1759
    %1825 = vmatmul.bf16.gmra.mxu0 %v1594
    %v1826 = vpop.f32.mrf.mxu0
    %v1827 = vadd.f32 %v1814, %v1826
    %v1828 = vpop.f32.mrf.mxu0
    %1829 = vdwg.mxu0
    %vm1830 = vcmask 31744
    %1831 = vst.msk [vmem:[%s5] sm:$0xff] %vm1830, %v1827
    // Predicated region
    $region26: #{tpu_custom_call.1} parent=1 // pred_check
      _
    $region27: #{tpu_custom_call.1} parent=1 // pred_check_branch
      %1833 = sbr.rel (0) target = $region29
    $region28: #{tpu_custom_call.1} parent=1 // pred_region
      _
    $region29: #{tpu_custom_call.1} parent=1 // pred_fallthru
      _
    // Predicated region
    $region30: #{tpu_custom_call.1} parent=1 // pred_check
      _
    $region31: #{tpu_custom_call.1} parent=1 // pred_check_branch
      %1835 = sbr.rel (0) target = $region33
    $region32: #{tpu_custom_call.1} parent=1 // pred_region
      _
    $region33: #{tpu_custom_call.1} parent=1 // pred_fallthru
      _
    %1836 = vsyncpa [#allocation3], 1

</llo_original>
